<compile_context>
chip_gen: v7x
topology: tpu7x:2x2x1
jax: 0.10.0
libtpu: 0.0.40
codegen_flags: <defaults>
</compile_context>

<pallas_src>
import jax
import jax.numpy as jnp
from jax.experimental import pallas as pl
from jax.experimental.pallas import tpu as pltpu

IMG = 28 * 28        # 784 logical features
IMG_PAD = 896        # 7 * 128: lane-aligned feature dim
HID = 256            # encoder/decoder hidden width
LAT = 32             # latent dimension
LAT2 = 2 * LAT       # fused mean|log_var head width


def vae_kernel(x_ref,                     # (TB, 896)  bf16
               w1_ref, b1_ref,            # (896, 256) bf16, (1, 256) f32
               wmv_ref, bmv_ref,          # (256, 64)  bf16, (1, 64)  f32
               wd1_ref, bd1_ref,          # (32, 256)  bf16, (1, 256) f32
               wd2_ref, bd2_ref,          # (256, 896) bf16, (1, 896) f32
               noise_ref,                 # (TB, 32)   f32
               out_ref):                  # (TB, 896)  f32
    # encoder_conv: Linear + ReLU  (bf16 MXU, f32 accumulate)
    h = jnp.dot(x_ref[...], w1_ref[...], preferred_element_type=jnp.float32)
    h = jnp.maximum(h + b1_ref[...], 0.0)

    # fused mean | log_var head: one Linear(256 -> 64), then slice
    mv = jnp.dot(h.astype(jnp.bfloat16), wmv_ref[...],
                 preferred_element_type=jnp.float32) + bmv_ref[...]
    mean = mv[:, :LAT]
    log_var = mv[:, LAT:]

    # reparameterization: z = mean + exp(0.5 * log_var) * noise   (f32, EUP)
    z = mean + jnp.exp(0.5 * log_var) * noise_ref[...]

    # decoder: Linear + ReLU + Linear + Sigmoid
    d = jnp.dot(z.astype(jnp.bfloat16), wd1_ref[...],
                preferred_element_type=jnp.float32)
    d = jnp.maximum(d + bd1_ref[...], 0.0)
    y = jnp.dot(d.astype(jnp.bfloat16), wd2_ref[...],
                preferred_element_type=jnp.float32) + bd2_ref[...]
    out_ref[...] = jax.nn.sigmoid(y)


def init_params(key):
    """Deterministic (seeded) f32 parameter init, Kaiming-ish scaling."""
    ks = jax.random.split(key, 5)

    def linear(k, fan_in, fan_out):
        kw, kb = jax.random.split(k)
        scale = 1.0 / jnp.sqrt(fan_in)
        w = jax.random.uniform(kw, (fan_in, fan_out), jnp.float32, -scale, scale)
        b = jax.random.uniform(kb, (1, fan_out), jnp.float32, -scale, scale)
        return w, b

    w1, b1 = linear(ks[0], IMG, HID)
    wm, bm = linear(ks[1], HID, LAT)
    wv, bv = linear(ks[2], HID, LAT)
    wd1, bd1 = linear(ks[3], LAT, HID)
    wd2, bd2 = linear(ks[4], HID, IMG)
    return dict(w1=w1, b1=b1, wm=wm, bm=bm, wv=wv, bv=bv,
                wd1=wd1, bd1=bd1, wd2=wd2, bd2=bd2)


def prepare_kernel_params(p):
    """Lane-align 784->896 (zero pad), fuse mean/log_var heads, cast matmul
    operands to bf16 (biases stay f32)."""
    w1 = jnp.pad(p["w1"], ((0, IMG_PAD - IMG), (0, 0))).astype(jnp.bfloat16)
    b1 = p["b1"]
    wmv = jnp.concatenate([p["wm"], p["wv"]], axis=1).astype(jnp.bfloat16)
    bmv = jnp.concatenate([p["bm"], p["bv"]], axis=1)
    wd1 = p["wd1"].astype(jnp.bfloat16)
    bd1 = p["bd1"]
    wd2 = jnp.pad(p["wd2"], ((0, 0), (0, IMG_PAD - IMG))).astype(jnp.bfloat16)
    bd2 = jnp.pad(p["bd2"], ((0, 0), (0, IMG_PAD - IMG)))
    return (w1, b1, wmv, bmv, wd1, bd1, wd2, bd2)


def vae_forward(x_nchw, params, noise_key, *, max_tile=256):
    """x_nchw: (B, 1, 28, 28) float32 -> (B, 1, 28, 28) float32."""
    B = x_nchw.shape[0]
    x_flat = x_nchw.reshape(B, -1).astype(jnp.float32)          # (B, 784)
    noise = jax.random.normal(noise_key, (B, LAT), jnp.float32)  # (B, 32)

    # Batch tile: multiple of 16 (bf16 sublane packing), capped at max_tile
    # (sized against v7x's smaller VMEM); pad B up to a multiple of it.
    TB = min(max_tile, max(16, -(-B // 16) * 16))
    B_pad = -(-B // TB) * TB
    grid = (B_pad // TB,)

    # Zero-pad batch rows and feature columns (padded rows/cols are sliced
    # off below, so the sigmoid(0)=0.5 on padded lanes never leaks out).
    x_p = jnp.zeros((B_pad, IMG_PAD), jnp.bfloat16)
    x_p = x_p.at[:B, :IMG].set(x_flat.astype(jnp.bfloat16))
    noise_p = jnp.zeros((B_pad, LAT), jnp.float32).at[:B].set(noise)

    kp = prepare_kernel_params(params)

    flops = 2 * B_pad * (IMG_PAD * HID + HID * LAT2 + LAT * HID + HID * IMG_PAD)
    bytes_accessed = (x_p.size * 2 + noise_p.size * 4 + B_pad * IMG_PAD * 4
                      + sum(int(a.size) * a.dtype.itemsize for a in kp))
    cost = pl.CostEstimate(
        flops=int(flops),
        transcendentals=int(B_pad * (LAT + IMG_PAD)),
        bytes_accessed=int(bytes_accessed),
    )

    out_pad = pl.pallas_call(
        vae_kernel,
        out_shape=jax.ShapeDtypeStruct((B_pad, IMG_PAD), jnp.float32),
        grid=grid,
        in_specs=[
            pl.BlockSpec((TB, IMG_PAD), lambda i: (i, 0)),     # x (per batch tile)
            pl.BlockSpec((IMG_PAD, HID), lambda i: (0, 0)),    # w1  (resident)
            pl.BlockSpec((1, HID), lambda i: (0, 0)),          # b1
            pl.BlockSpec((HID, LAT2), lambda i: (0, 0)),       # wmv (fused heads)
            pl.BlockSpec((1, LAT2), lambda i: (0, 0)),         # bmv
            pl.BlockSpec((LAT, HID), lambda i: (0, 0)),        # wd1
            pl.BlockSpec((1, HID), lambda i: (0, 0)),          # bd1
            pl.BlockSpec((HID, IMG_PAD), lambda i: (0, 0)),    # wd2
            pl.BlockSpec((1, IMG_PAD), lambda i: (0, 0)),      # bd2
            pl.BlockSpec((TB, LAT), lambda i: (i, 0)),         # noise (per tile)
        ],
        out_specs=pl.BlockSpec((TB, IMG_PAD), lambda i: (i, 0)),
        compiler_params=pltpu.CompilerParams(
            dimension_semantics=("parallel",),
            vmem_limit_bytes=32 * 1024 * 1024,
        ),
        cost_estimate=cost,
    )(x_p, *kp, noise_p)

    # Slice padded batch rows and padded feature lanes back off.
    return out_pad[:B, :IMG].reshape(B, 1, 28, 28)


if __name__ == "__main__":
    key = jax.random.PRNGKey(0)
    kparam, kinput, knoise = jax.random.split(key, 3)

    params = init_params(kparam)
    # small batch of "images": NCHW, B=2, 1 channel, 28x28 (forced by the
    # decoder's reshape to (B, 1, 28, 28))
    x = jax.random.uniform(kinput, (2, 1, 28, 28), jnp.float32)

    out = vae_forward(x, params, knoise)
    jax.block_until_ready(out)

    assert out.shape == (2, 1, 28, 28)
    assert out.dtype == jnp.float32
    assert bool(jnp.all(jnp.isfinite(out)))
    print("KERNEL_OK")
</pallas_src>

<mosaic_0001>
module attributes {stable_mosaic.version = 11 : i64} {
  func.func @vae_kernel(%arg0: i32, %arg1: memref<16x896xbf16, #tpu.memory_space<vmem>>, %arg2: memref<896x256xbf16, #tpu.memory_space<vmem>>, %arg3: memref<1x256xf32, #tpu.memory_space<vmem>>, %arg4: memref<256x64xbf16, #tpu.memory_space<vmem>>, %arg5: memref<1x64xf32, #tpu.memory_space<vmem>>, %arg6: memref<32x256xbf16, #tpu.memory_space<vmem>>, %arg7: memref<1x256xf32, #tpu.memory_space<vmem>>, %arg8: memref<256x896xbf16, #tpu.memory_space<vmem>>, %arg9: memref<1x896xf32, #tpu.memory_space<vmem>>, %arg10: memref<16x32xf32, #tpu.memory_space<vmem>>, %arg11: memref<16x896xf32, #tpu.memory_space<vmem>>) attributes {dimension_semantics = [#tpu.dimension_semantics<parallel>], iteration_bounds = array<i64: 1>, scalar_prefetch = 0 : i64, scratch_operands = 0 : i64, tpu.core_type = #tpu.core_type<tc>, window_params = [{transform_indices = @transform_0, window_bounds = array<i64: 16, 896>}, {pipeline_mode = #tpu.pipeline_mode<synchronous>, transform_indices = @transform_1, window_bounds = array<i64: 896, 256>}, {pipeline_mode = #tpu.pipeline_mode<synchronous>, transform_indices = @transform_2, window_bounds = array<i64: 1, 256>}, {pipeline_mode = #tpu.pipeline_mode<synchronous>, transform_indices = @transform_3, window_bounds = array<i64: 256, 64>}, {pipeline_mode = #tpu.pipeline_mode<synchronous>, transform_indices = @transform_4, window_bounds = array<i64: 1, 64>}, {pipeline_mode = #tpu.pipeline_mode<synchronous>, transform_indices = @transform_5, window_bounds = array<i64: 32, 256>}, {pipeline_mode = #tpu.pipeline_mode<synchronous>, transform_indices = @transform_6, window_bounds = array<i64: 1, 256>}, {pipeline_mode = #tpu.pipeline_mode<synchronous>, transform_indices = @transform_7, window_bounds = array<i64: 256, 896>}, {pipeline_mode = #tpu.pipeline_mode<synchronous>, transform_indices = @transform_8, window_bounds = array<i64: 1, 896>}, {transform_indices = @transform_9, window_bounds = array<i64: 16, 32>}, {transform_indices = @transform_10, window_bounds = array<i64: 16, 896>}]} {
    %c0 = arith.constant 0 : index
    %c0_0 = arith.constant 0 : index
    %0 = vector.load %arg1[%c0, %c0_0] : memref<16x896xbf16, #tpu.memory_space<vmem>>, vector<16x896xbf16>
    %c0_1 = arith.constant 0 : index
    %c0_2 = arith.constant 0 : index
    %1 = vector.load %arg2[%c0_1, %c0_2] : memref<896x256xbf16, #tpu.memory_space<vmem>>, vector<896x256xbf16>
    %cst = arith.constant dense<0.000000e+00> : vector<16x256xf32>
    %2 = tpu.matmul %0, %1, %cst {dimension_numbers = #tpu.dot_dimension_numbers<[1], [0], [0], [1], [0, 0, 1, 1], [], []>} : vector<16x896xbf16>, vector<896x256xbf16>, vector<16x256xf32> -> vector<16x256xf32>
    %c0_3 = arith.constant 0 : index
    %c0_4 = arith.constant 0 : index
    %3 = vector.load %arg3[%c0_3, %c0_4] : memref<1x256xf32, #tpu.memory_space<vmem>>, vector<1x256xf32>
    %4 = vector.broadcast %3 : vector<1x256xf32> to vector<16x256xf32>
    %5 = arith.addf %2, %4 : vector<16x256xf32>
    %cst_5 = arith.constant 0.000000e+00 : f32
    %6 = vector.broadcast %cst_5 : f32 to vector<16x256xf32>
    %7 = arith.maximumf %5, %6 : vector<16x256xf32>
    %8 = arith.truncf %7 : vector<16x256xf32> to vector<16x256xbf16>
    %c0_6 = arith.constant 0 : index
    %c0_7 = arith.constant 0 : index
    %9 = vector.load %arg4[%c0_6, %c0_7] : memref<256x64xbf16, #tpu.memory_space<vmem>>, vector<256x64xbf16>
    %cst_8 = arith.constant dense<0.000000e+00> : vector<16x64xf32>
    %10 = tpu.matmul %8, %9, %cst_8 {dimension_numbers = #tpu.dot_dimension_numbers<[1], [0], [0], [1], [0, 0, 1, 1], [], []>} : vector<16x256xbf16>, vector<256x64xbf16>, vector<16x64xf32> -> vector<16x64xf32>
    %c0_9 = arith.constant 0 : index
    %c0_10 = arith.constant 0 : index
    %11 = vector.load %arg5[%c0_9, %c0_10] : memref<1x64xf32, #tpu.memory_space<vmem>>, vector<1x64xf32>
    %12 = vector.broadcast %11 : vector<1x64xf32> to vector<16x64xf32>
    %13 = arith.addf %10, %12 : vector<16x64xf32>
    %14 = vector.extract_strided_slice %13 {offsets = [0, 0], sizes = [16, 32], strides = [1, 1]} : vector<16x64xf32> to vector<16x32xf32>
    %15 = vector.extract_strided_slice %13 {offsets = [0, 32], sizes = [16, 32], strides = [1, 1]} : vector<16x64xf32> to vector<16x32xf32>
    %cst_11 = arith.constant 5.000000e-01 : f32
    %16 = vector.broadcast %cst_11 : f32 to vector<16x32xf32>
    %17 = arith.mulf %16, %15 : vector<16x32xf32>
    %18 = math.exp %17 : vector<16x32xf32>
    %c0_12 = arith.constant 0 : index
    %c0_13 = arith.constant 0 : index
    %19 = vector.load %arg10[%c0_12, %c0_13] : memref<16x32xf32, #tpu.memory_space<vmem>>, vector<16x32xf32>
    %20 = arith.mulf %18, %19 : vector<16x32xf32>
    %21 = arith.addf %14, %20 : vector<16x32xf32>
    %22 = arith.truncf %21 : vector<16x32xf32> to vector<16x32xbf16>
    %c0_14 = arith.constant 0 : index
    %c0_15 = arith.constant 0 : index
    %23 = vector.load %arg6[%c0_14, %c0_15] : memref<32x256xbf16, #tpu.memory_space<vmem>>, vector<32x256xbf16>
    %cst_16 = arith.constant dense<0.000000e+00> : vector<16x256xf32>
    %24 = tpu.matmul %22, %23, %cst_16 {dimension_numbers = #tpu.dot_dimension_numbers<[1], [0], [0], [1], [0, 0, 1, 1], [], []>} : vector<16x32xbf16>, vector<32x256xbf16>, vector<16x256xf32> -> vector<16x256xf32>
    %c0_17 = arith.constant 0 : index
    %c0_18 = arith.constant 0 : index
    %25 = vector.load %arg7[%c0_17, %c0_18] : memref<1x256xf32, #tpu.memory_space<vmem>>, vector<1x256xf32>
    %26 = vector.broadcast %25 : vector<1x256xf32> to vector<16x256xf32>
    %27 = arith.addf %24, %26 : vector<16x256xf32>
    %cst_19 = arith.constant 0.000000e+00 : f32
    %28 = vector.broadcast %cst_19 : f32 to vector<16x256xf32>
    %29 = arith.maximumf %27, %28 : vector<16x256xf32>
    %30 = arith.truncf %29 : vector<16x256xf32> to vector<16x256xbf16>
    %c0_20 = arith.constant 0 : index
    %c0_21 = arith.constant 0 : index
    %31 = vector.load %arg8[%c0_20, %c0_21] : memref<256x896xbf16, #tpu.memory_space<vmem>>, vector<256x896xbf16>
    %cst_22 = arith.constant dense<0.000000e+00> : vector<16x896xf32>
    %32 = tpu.matmul %30, %31, %cst_22 {dimension_numbers = #tpu.dot_dimension_numbers<[1], [0], [0], [1], [0, 0, 1, 1], [], []>} : vector<16x256xbf16>, vector<256x896xbf16>, vector<16x896xf32> -> vector<16x896xf32>
    %c0_23 = arith.constant 0 : index
    %c0_24 = arith.constant 0 : index
    %33 = vector.load %arg9[%c0_23, %c0_24] : memref<1x896xf32, #tpu.memory_space<vmem>>, vector<1x896xf32>
    %34 = vector.broadcast %33 : vector<1x896xf32> to vector<16x896xf32>
    %35 = arith.addf %32, %34 : vector<16x896xf32>
    %36 = arith.negf %35 : vector<16x896xf32>
    %37 = math.exp %36 : vector<16x896xf32>
    %cst_25 = arith.constant 1.000000e+00 : f32
    %38 = vector.broadcast %cst_25 : f32 to vector<16x896xf32>
    %39 = arith.addf %38, %37 : vector<16x896xf32>
    %40 = arith.divf %38, %39 : vector<16x896xf32>
    %c0_26 = arith.constant 0 : index
    %c0_27 = arith.constant 0 : index
    %41 = vector.load %arg11[%c0_26, %c0_27] : memref<16x896xf32, #tpu.memory_space<vmem>>, vector<16x896xf32>
    tpu.vector_store %arg11[%c0_26, %c0_27], %40 {strides = array<i32>} : memref<16x896xf32, #tpu.memory_space<vmem>>, vector<16x896xf32>,
    return
  }
  func.func @transform_0(%arg0: i32) -> (i32, i32) {
    %c0_i32 = arith.constant 0 : i32
    %c0_i32_0 = arith.constant 0 : i32
    return %arg0, %c0_i32 : i32, i32
  }
  func.func @transform_1(%arg0: i32) -> (i32, i32) {
    %c0_i32 = arith.constant 0 : i32
    %c0_i32_0 = arith.constant 0 : i32
    %c0_i32_1 = arith.constant 0 : i32
    return %c0_i32, %c0_i32_0 : i32, i32
  }
  func.func @transform_2(%arg0: i32) -> (i32, i32) {
    %c0_i32 = arith.constant 0 : i32
    %c0_i32_0 = arith.constant 0 : i32
    %c0_i32_1 = arith.constant 0 : i32
    return %c0_i32, %c0_i32_0 : i32, i32
  }
  func.func @transform_3(%arg0: i32) -> (i32, i32) {
    %c0_i32 = arith.constant 0 : i32
    %c0_i32_0 = arith.constant 0 : i32
    %c0_i32_1 = arith.constant 0 : i32
    return %c0_i32, %c0_i32_0 : i32, i32
  }
  func.func @transform_4(%arg0: i32) -> (i32, i32) {
    %c0_i32 = arith.constant 0 : i32
    %c0_i32_0 = arith.constant 0 : i32
    %c0_i32_1 = arith.constant 0 : i32
    return %c0_i32, %c0_i32_0 : i32, i32
  }
  func.func @transform_5(%arg0: i32) -> (i32, i32) {
    %c0_i32 = arith.constant 0 : i32
    %c0_i32_0 = arith.constant 0 : i32
    %c0_i32_1 = arith.constant 0 : i32
    return %c0_i32, %c0_i32_0 : i32, i32
  }
  func.func @transform_6(%arg0: i32) -> (i32, i32) {
    %c0_i32 = arith.constant 0 : i32
    %c0_i32_0 = arith.constant 0 : i32
    %c0_i32_1 = arith.constant 0 : i32
    return %c0_i32, %c0_i32_0 : i32, i32
  }
  func.func @transform_7(%arg0: i32) -> (i32, i32) {
    %c0_i32 = arith.constant 0 : i32
    %c0_i32_0 = arith.constant 0 : i32
    %c0_i32_1 = arith.constant 0 : i32
    return %c0_i32, %c0_i32_0 : i32, i32
  }
  func.func @transform_8(%arg0: i32) -> (i32, i32) {
    %c0_i32 = arith.constant 0 : i32
    %c0_i32_0 = arith.constant 0 : i32
    %c0_i32_1 = arith.constant 0 : i32
    return %c0_i32, %c0_i32_0 : i32, i32
  }
  func.func @transform_9(%arg0: i32) -> (i32, i32) {
    %c0_i32 = arith.constant 0 : i32
    %c0_i32_0 = arith.constant 0 : i32
    return %arg0, %c0_i32 : i32, i32
  }
  func.func @transform_10(%arg0: i32) -> (i32, i32) {
    %c0_i32 = arith.constant 0 : i32
    %c0_i32_0 = arith.constant 0 : i32
    return %arg0, %c0_i32 : i32, i32
  }
}

</mosaic_0001>

<llo_original>
// kernel: tpu_custom_call.1
$region0: #{tpu_custom_call.1}
  #allocation0 [shape = 'u32[]', space=smem, size = 0x4, offset = 0x4, fixed_abs, tag = 'smem constant byte address 0x4 - core index']
  #allocation1 [shape = 'u32[144,128]{1,0:T(1,128)}', space=vmem, size = 0x12000, scoped, tag = 'internal scratch']
  %s0 = inlined_call_operand.vmem [shape: bf16[16,896], index: 0, kind: input, shape index: {}]
  %s1 = inlined_call_operand.hbm [shape: bf16[896,256], index: 1, kind: input, shape index: {}]
  %s2 = inlined_call_operand.vmem [shape: f32[1,256], index: 2, kind: input, shape index: {}]
  %s3 = inlined_call_operand.vmem [shape: bf16[256,64], index: 3, kind: input, shape index: {}]
  %s4 = inlined_call_operand.vmem [shape: f32[1,64], index: 4, kind: input, shape index: {}]
  %s5 = inlined_call_operand.vmem [shape: bf16[32,256], index: 5, kind: input, shape index: {}]
  %s6 = inlined_call_operand.vmem [shape: f32[1,256], index: 6, kind: input, shape index: {}]
  %s7 = inlined_call_operand.hbm [shape: bf16[256,896], index: 7, kind: input, shape index: {}]
  %s8 = inlined_call_operand.vmem [shape: f32[1,896], index: 8, kind: input, shape index: {}]
  %s9 = inlined_call_operand.vmem [shape: f32[16,32], index: 9, kind: input, shape index: {}]
  %s10 = inlined_call_operand.hbm [shape: f32[16,896], index: 10, kind: output, shape index: {}]
  %s11 = sld [smem:[#allocation0]]
  $region58: #{tpu_custom_call.1} parent=0
    _
  %s13 = ssub.s32 1, %s11
  %s14 = scalar_select 0, %s13, %s11
  $region1: #{tpu_custom_call.1} parent=0
    #allocation2 [shape = 'u8[458752]{0}', space=vmem, size = 0x70000, scoped, tag = 'input window, operand 1, single buffered']
    #allocation3 [shape = 's32[1]{0}', space=sflag, size = 0x4, scoped, tag = 'scoped memory for tpu_custom_call.1']
    #allocation4 [shape = 's32[1]{0}', space=sflag, size = 0x4, scoped, tag = 'scoped memory for tpu_custom_call.1']
    #allocation5 [shape = 'u8[458752]{0}', space=vmem, size = 0x70000, scoped, tag = 'input window, operand 7, single buffered']
    #allocation6 [shape = 's32[1]{0}', space=sflag, size = 0x4, scoped, tag = 'scoped memory for tpu_custom_call.1']
    #allocation7 [shape = 'u8[57344]{0}', space=vmem, size = 0xe000, scoped, tag = 'output window, operand 0, single buffered']
    %15 = vsyncpa [#allocation3], 0
    %16 = vsyncpa [#allocation6], 0
    %17 = vsyncpa [#allocation4], 0
    // Predicated region
    $region2: #{tpu_custom_call.1} parent=1 // pred_check
      _
    $region3: #{tpu_custom_call.1} parent=1 // pred_check_branch
      %19 = sbr.rel (0) target = $region5
    $region4: #{tpu_custom_call.1} parent=1 // pred_region
      _
    $region5: #{tpu_custom_call.1} parent=1 // pred_fallthru
      _
    // Predicated region
    $region6: #{tpu_custom_call.1} parent=1 // pred_check
      _
    $region7: #{tpu_custom_call.1} parent=1 // pred_check_branch
      %21 = sbr.rel (0) target = $region9
    $region8: #{tpu_custom_call.1} parent=1 // pred_region
      %s23 = ssub.s32 14336, 14336
      %24 = vsyncadd [#allocation3], %s23
      %s25 = sshll.u32 [#allocation2], 4
      %s26 = int_to_ptr.vmem [resolvable:$true] %s25
      %31 = dma.hbm_to_vmem [thread:$0]  %s1, 14336, %s26, [#allocation3], 128, 128, 8
    $region9: #{tpu_custom_call.1} parent=1 // pred_fallthru
      _
    // Predicated region
    $region10: #{tpu_custom_call.1} parent=1 // pred_check
      _
    $region11: #{tpu_custom_call.1} parent=1 // pred_check_branch
      %33 = sbr.rel (0) target = $region13
    $region12: #{tpu_custom_call.1} parent=1 // pred_region
      _
    $region13: #{tpu_custom_call.1} parent=1 // pred_fallthru
      _
    // Predicated region
    $region14: #{tpu_custom_call.1} parent=1 // pred_check
      _
    $region15: #{tpu_custom_call.1} parent=1 // pred_check_branch
      %35 = sbr.rel (0) target = $region17
    $region16: #{tpu_custom_call.1} parent=1 // pred_region
      _
    $region17: #{tpu_custom_call.1} parent=1 // pred_fallthru
      _
    // Predicated region
    $region18: #{tpu_custom_call.1} parent=1 // pred_check
      _
    $region19: #{tpu_custom_call.1} parent=1 // pred_check_branch
      %37 = sbr.rel (0) target = $region21
    $region20: #{tpu_custom_call.1} parent=1 // pred_region
      _
    $region21: #{tpu_custom_call.1} parent=1 // pred_fallthru
      _
    // Predicated region
    $region22: #{tpu_custom_call.1} parent=1 // pred_check
      _
    $region23: #{tpu_custom_call.1} parent=1 // pred_check_branch
      %39 = sbr.rel (0) target = $region25
    $region24: #{tpu_custom_call.1} parent=1 // pred_region
      _
    $region25: #{tpu_custom_call.1} parent=1 // pred_fallthru
      _
    // Predicated region
    $region26: #{tpu_custom_call.1} parent=1 // pred_check
      _
    $region27: #{tpu_custom_call.1} parent=1 // pred_check_branch
      %41 = sbr.rel (0) target = $region29
    $region28: #{tpu_custom_call.1} parent=1 // pred_region
      _
    $region29: #{tpu_custom_call.1} parent=1 // pred_fallthru
      _
    // Predicated region
    $region30: #{tpu_custom_call.1} parent=1 // pred_check
      _
    $region31: #{tpu_custom_call.1} parent=1 // pred_check_branch
      %43 = sbr.rel (0) target = $region33
    $region32: #{tpu_custom_call.1} parent=1 // pred_region
      %s45 = ssub.s32 14336, 14336
      %46 = vsyncadd [#allocation6], %s45
      %s47 = sshll.u32 [#allocation5], 4
      %s48 = int_to_ptr.vmem [resolvable:$true] %s47
      %53 = dma.hbm_to_vmem [thread:$0]  %s7, 14336, %s48, [#allocation6], 448, 448, 28
    $region33: #{tpu_custom_call.1} parent=1 // pred_fallthru
      _
    // Predicated region
    $region34: #{tpu_custom_call.1} parent=1 // pred_check
      _
    $region35: #{tpu_custom_call.1} parent=1 // pred_check_branch
      %55 = sbr.rel (0) target = $region37
    $region36: #{tpu_custom_call.1} parent=1 // pred_region
      _
    $region37: #{tpu_custom_call.1} parent=1 // pred_fallthru
      _
    // Predicated region
    $region38: #{tpu_custom_call.1} parent=1 // pred_check
      _
    $region39: #{tpu_custom_call.1} parent=1 // pred_check_branch
      %57 = sbr.rel (0) target = $region41
    $region40: #{tpu_custom_call.1} parent=1 // pred_region
      _
    $region41: #{tpu_custom_call.1} parent=1 // pred_fallthru
      _
    // Predicated region
    $region42: #{tpu_custom_call.1} parent=1 // pred_check
      _
    $region43: #{tpu_custom_call.1} parent=1 // pred_check_branch
      %59 = sbr.rel (0) target = $region45
    $region44: #{tpu_custom_call.1} parent=1 // pred_region
      %60 = dma.done [#allocation3], 14336
    $region45: #{tpu_custom_call.1} parent=1 // pred_fallthru
      _
    // Predicated region
    $region46: #{tpu_custom_call.1} parent=1 // pred_check
      _
    $region47: #{tpu_custom_call.1} parent=1 // pred_check_branch
      %62 = sbr.rel (0) target = $region49
    $region48: #{tpu_custom_call.1} parent=1 // pred_region
      %63 = dma.done [#allocation6], 14336
    $region49: #{tpu_custom_call.1} parent=1 // pred_fallthru
      _
    %v65 = vld [vmem:[%s0] sm:$0xff]
    %v66 = vld [vmem:[%s0 + $0x8] sm:$0xff]
    %v67 = vld [vmem:[%s0 + $0x10] sm:$0xff]
    %v68 = vld [vmem:[%s0 + $0x18] sm:$0xf]
    %v69 = vld [vmem:[%s0 + $0x1c] sm:$0xff]
    %v70 = vld [vmem:[%s0 + $0x24] sm:$0xff]
    %v71 = vld [vmem:[%s0 + $0x2c] sm:$0xff]
    %v72 = vld [vmem:[%s0 + $0x34] sm:$0xf]
    %v73 = vld [vmem:[#allocation2] sm:$0xff]
    %v74 = vld [vmem:[#allocation2 + $0x8] sm:$0xff]
    %v75 = vld [vmem:[#allocation2 + $0x10] sm:$0xff]
    %v76 = vld [vmem:[#allocation2 + $0x18] sm:$0xff]
    %v77 = vld [vmem:[#allocation2 + $0x20] sm:$0xff]
    %v78 = vld [vmem:[#allocation2 + $0x28] sm:$0xff]
    %v79 = vld [vmem:[#allocation2 + $0x30] sm:$0xff]
    %v80 = vld [vmem:[#allocation2 + $0x38] sm:$0xff]
    %v81 = vld [vmem:[#allocation2 + $0x40] sm:$0xff]
    %v82 = vld [vmem:[#allocation2 + $0x48] sm:$0xff]
    %v83 = vld [vmem:[#allocation2 + $0x50] sm:$0xff]
    %v84 = vld [vmem:[#allocation2 + $0x58] sm:$0xff]
    %v85 = vld [vmem:[#allocation2 + $0x60] sm:$0xff]
    %v86 = vld [vmem:[#allocation2 + $0x68] sm:$0xff]
    %v87 = vld [vmem:[#allocation2 + $0x70] sm:$0xff]
    %v88 = vld [vmem:[#allocation2 + $0x78] sm:$0xff]
    %v89 = vld [vmem:[#allocation2 + $0x80] sm:$0xff]
    %v90 = vld [vmem:[#allocation2 + $0x88] sm:$0xff]
    %v91 = vld [vmem:[#allocation2 + $0x90] sm:$0xff]
    %v92 = vld [vmem:[#allocation2 + $0x98] sm:$0xff]
    %v93 = vld [vmem:[#allocation2 + $0xa0] sm:$0xff]
    %v94 = vld [vmem:[#allocation2 + $0xa8] sm:$0xff]
    %v95 = vld [vmem:[#allocation2 + $0xb0] sm:$0xff]
    %v96 = vld [vmem:[#allocation2 + $0xb8] sm:$0xff]
    %v97 = vld [vmem:[#allocation2 + $0xc0] sm:$0xff]
    %v98 = vld [vmem:[#allocation2 + $0xc8] sm:$0xff]
    %v99 = vld [vmem:[#allocation2 + $0xd0] sm:$0xff]
    %v100 = vld [vmem:[#allocation2 + $0xd8] sm:$0xff]
    %v101 = vld [vmem:[#allocation2 + $0xe0] sm:$0xff]
    %v102 = vld [vmem:[#allocation2 + $0xe8] sm:$0xff]
    %v103 = vld [vmem:[#allocation2 + $0xf0] sm:$0xff]
    %v104 = vld [vmem:[#allocation2 + $0xf8] sm:$0xff]
    %v105 = vld [vmem:[#allocation2 + $0x100] sm:$0xff]
    %v106 = vld [vmem:[#allocation2 + $0x108] sm:$0xff]
    %v107 = vld [vmem:[#allocation2 + $0x110] sm:$0xff]
    %v108 = vld [vmem:[#allocation2 + $0x118] sm:$0xff]
    %v109 = vld [vmem:[#allocation2 + $0x120] sm:$0xff]
    %v110 = vld [vmem:[#allocation2 + $0x128] sm:$0xff]
    %v111 = vld [vmem:[#allocation2 + $0x130] sm:$0xff]
    %v112 = vld [vmem:[#allocation2 + $0x138] sm:$0xff]
    %v113 = vld [vmem:[#allocation2 + $0x140] sm:$0xff]
    %v114 = vld [vmem:[#allocation2 + $0x148] sm:$0xff]
    %v115 = vld [vmem:[#allocation2 + $0x150] sm:$0xff]
    %v116 = vld [vmem:[#allocation2 + $0x158] sm:$0xff]
    %v117 = vld [vmem:[#allocation2 + $0x160] sm:$0xff]
    %v118 = vld [vmem:[#allocation2 + $0x168] sm:$0xff]
    %v119 = vld [vmem:[#allocation2 + $0x170] sm:$0xff]
    %v120 = vld [vmem:[#allocation2 + $0x178] sm:$0xff]
    %v121 = vld [vmem:[#allocation2 + $0x180] sm:$0xff]
    %v122 = vld [vmem:[#allocation2 + $0x188] sm:$0xff]
    %v123 = vld [vmem:[#allocation2 + $0x190] sm:$0xff]
    %v124 = vld [vmem:[#allocation2 + $0x198] sm:$0xff]
    %v125 = vld [vmem:[#allocation2 + $0x1a0] sm:$0xff]
    %v126 = vld [vmem:[#allocation2 + $0x1a8] sm:$0xff]
    %v127 = vld [vmem:[#allocation2 + $0x1b0] sm:$0xff]
    %v128 = vld [vmem:[#allocation2 + $0x1b8] sm:$0xff]
    %v129 = vld [vmem:[#allocation2 + $0x1c0] sm:$0xff]
    %v130 = vld [vmem:[#allocation2 + $0x1c8] sm:$0xff]
    %v131 = vld [vmem:[#allocation2 + $0x1d0] sm:$0xff]
    %v132 = vld [vmem:[#allocation2 + $0x1d8] sm:$0xff]
    %v133 = vld [vmem:[#allocation2 + $0x1e0] sm:$0xff]
    %v134 = vld [vmem:[#allocation2 + $0x1e8] sm:$0xff]
    %v135 = vld [vmem:[#allocation2 + $0x1f0] sm:$0xff]
    %v136 = vld [vmem:[#allocation2 + $0x1f8] sm:$0xff]
    %v137 = vld [vmem:[#allocation2 + $0x200] sm:$0xff]
    %v138 = vld [vmem:[#allocation2 + $0x208] sm:$0xff]
    %v139 = vld [vmem:[#allocation2 + $0x210] sm:$0xff]
    %v140 = vld [vmem:[#allocation2 + $0x218] sm:$0xff]
    %v141 = vld [vmem:[#allocation2 + $0x220] sm:$0xff]
    %v142 = vld [vmem:[#allocation2 + $0x228] sm:$0xff]
    %v143 = vld [vmem:[#allocation2 + $0x230] sm:$0xff]
    %v144 = vld [vmem:[#allocation2 + $0x238] sm:$0xff]
    %v145 = vld [vmem:[#allocation2 + $0x240] sm:$0xff]
    %v146 = vld [vmem:[#allocation2 + $0x248] sm:$0xff]
    %v147 = vld [vmem:[#allocation2 + $0x250] sm:$0xff]
    %v148 = vld [vmem:[#allocation2 + $0x258] sm:$0xff]
    %v149 = vld [vmem:[#allocation2 + $0x260] sm:$0xff]
    %v150 = vld [vmem:[#allocation2 + $0x268] sm:$0xff]
    %v151 = vld [vmem:[#allocation2 + $0x270] sm:$0xff]
    %v152 = vld [vmem:[#allocation2 + $0x278] sm:$0xff]
    %v153 = vld [vmem:[#allocation2 + $0x280] sm:$0xff]
    %v154 = vld [vmem:[#allocation2 + $0x288] sm:$0xff]
    %v155 = vld [vmem:[#allocation2 + $0x290] sm:$0xff]
    %v156 = vld [vmem:[#allocation2 + $0x298] sm:$0xff]
    %v157 = vld [vmem:[#allocation2 + $0x2a0] sm:$0xff]
    %v158 = vld [vmem:[#allocation2 + $0x2a8] sm:$0xff]
    %v159 = vld [vmem:[#allocation2 + $0x2b0] sm:$0xff]
    %v160 = vld [vmem:[#allocation2 + $0x2b8] sm:$0xff]
    %v161 = vld [vmem:[#allocation2 + $0x2c0] sm:$0xff]
    %v162 = vld [vmem:[#allocation2 + $0x2c8] sm:$0xff]
    %v163 = vld [vmem:[#allocation2 + $0x2d0] sm:$0xff]
    %v164 = vld [vmem:[#allocation2 + $0x2d8] sm:$0xff]
    %v165 = vld [vmem:[#allocation2 + $0x2e0] sm:$0xff]
    %v166 = vld [vmem:[#allocation2 + $0x2e8] sm:$0xff]
    %v167 = vld [vmem:[#allocation2 + $0x2f0] sm:$0xff]
    %v168 = vld [vmem:[#allocation2 + $0x2f8] sm:$0xff]
    %v169 = vld [vmem:[#allocation2 + $0x300] sm:$0xff]
    %v170 = vld [vmem:[#allocation2 + $0x308] sm:$0xff]
    %v171 = vld [vmem:[#allocation2 + $0x310] sm:$0xff]
    %v172 = vld [vmem:[#allocation2 + $0x318] sm:$0xff]
    %v173 = vld [vmem:[#allocation2 + $0x320] sm:$0xff]
    %v174 = vld [vmem:[#allocation2 + $0x328] sm:$0xff]
    %v175 = vld [vmem:[#allocation2 + $0x330] sm:$0xff]
    %v176 = vld [vmem:[#allocation2 + $0x338] sm:$0xff]
    %v177 = vld [vmem:[#allocation2 + $0x340] sm:$0xff]
    %v178 = vld [vmem:[#allocation2 + $0x348] sm:$0xff]
    %v179 = vld [vmem:[#allocation2 + $0x350] sm:$0xff]
    %v180 = vld [vmem:[#allocation2 + $0x358] sm:$0xff]
    %v181 = vld [vmem:[#allocation2 + $0x360] sm:$0xff]
    %v182 = vld [vmem:[#allocation2 + $0x368] sm:$0xff]
    %v183 = vld [vmem:[#allocation2 + $0x370] sm:$0xff]
    %v184 = vld [vmem:[#allocation2 + $0x378] sm:$0xff]
    %v185 = vld [vmem:[%s2] sm:$0x3]
    %v187 = vlaneseq
    %v188 = vshrl.u32 %v187, 7
    %v189 = vsub.s32 0, %v188
    %v190 = vrot.slane %v185, %v189
    %v191 = vlaneseq
    %v192 = vshrl.u32 %v191, 7
    %v193 = vsub.s32 1, %v192
    %v194 = vrot.slane %v185, %v193
    %v205 = vunpack.c.l.b16 %v65
    %v206 = vunpack.c.h.b16 %v65
    %v207 = vunpack.c.l.b16 %v66
    %v208 = vunpack.c.h.b16 %v66
    %v209 = vunpack.c.l.b16 %v67
    %v210 = vunpack.c.h.b16 %v67
    %v211 = vunpack.c.l.b16 %v68
    %v212 = vunpack.c.l.b16 %v69
    %v213 = vunpack.c.h.b16 %v69
    %v214 = vunpack.c.l.b16 %v70
    %v215 = vunpack.c.h.b16 %v70
    %v216 = vunpack.c.l.b16 %v71
    %v217 = vunpack.c.h.b16 %v71
    %v218 = vunpack.c.l.b16 %v72
    %v219 = vpack.c.b16 %v212, %v205
    %v220 = vpack.c.b16 %v213, %v206
    %v221 = vpack.c.b16 %v214, %v207
    %v222 = vpack.c.b16 %v215, %v208
    %v223 = vpack.c.b16 %v216, %v209
    %v224 = vpack.c.b16 %v217, %v210
    %v225 = vpack.c.b16 %v218, %v211
    %v345 = vunpack.c.l.b16 %v73
    %v346 = vunpack.c.h.b16 %v73
    %v347 = vunpack.c.l.b16 %v74
    %v348 = vunpack.c.h.b16 %v74
    %v349 = vunpack.c.l.b16 %v75
    %v350 = vunpack.c.h.b16 %v75
    %v351 = vunpack.c.l.b16 %v76
    %v352 = vunpack.c.h.b16 %v76
    %v353 = vunpack.c.l.b16 %v77
    %v354 = vunpack.c.h.b16 %v77
    %v355 = vunpack.c.l.b16 %v78
    %v356 = vunpack.c.h.b16 %v78
    %v357 = vunpack.c.l.b16 %v79
    %v358 = vunpack.c.h.b16 %v79
    %v359 = vunpack.c.l.b16 %v80
    %v360 = vunpack.c.h.b16 %v80
    %v361 = vunpack.c.l.b16 %v81
    %v362 = vunpack.c.h.b16 %v81
    %v363 = vunpack.c.l.b16 %v82
    %v364 = vunpack.c.h.b16 %v82
    %v365 = vunpack.c.l.b16 %v83
    %v366 = vunpack.c.h.b16 %v83
    %v367 = vunpack.c.l.b16 %v84
    %v368 = vunpack.c.h.b16 %v84
    %v369 = vunpack.c.l.b16 %v85
    %v370 = vunpack.c.h.b16 %v85
    %v371 = vunpack.c.l.b16 %v86
    %v372 = vunpack.c.h.b16 %v86
    %v373 = vunpack.c.l.b16 %v87
    %v374 = vunpack.c.h.b16 %v87
    %v375 = vunpack.c.l.b16 %v88
    %v376 = vunpack.c.h.b16 %v88
    %v377 = vunpack.c.l.b16 %v89
    %v378 = vunpack.c.h.b16 %v89
    %v379 = vunpack.c.l.b16 %v90
    %v380 = vunpack.c.h.b16 %v90
    %v381 = vunpack.c.l.b16 %v91
    %v382 = vunpack.c.h.b16 %v91
    %v383 = vunpack.c.l.b16 %v92
    %v384 = vunpack.c.h.b16 %v92
    %v385 = vunpack.c.l.b16 %v93
    %v386 = vunpack.c.h.b16 %v93
    %v387 = vunpack.c.l.b16 %v94
    %v388 = vunpack.c.h.b16 %v94
    %v389 = vunpack.c.l.b16 %v95
    %v390 = vunpack.c.h.b16 %v95
    %v391 = vunpack.c.l.b16 %v96
    %v392 = vunpack.c.h.b16 %v96
    %v393 = vunpack.c.l.b16 %v97
    %v394 = vunpack.c.h.b16 %v97
    %v395 = vunpack.c.l.b16 %v98
    %v396 = vunpack.c.h.b16 %v98
    %v397 = vunpack.c.l.b16 %v99
    %v398 = vunpack.c.h.b16 %v99
    %v399 = vunpack.c.l.b16 %v100
    %v400 = vunpack.c.h.b16 %v100
    %v401 = vunpack.c.l.b16 %v101
    %v402 = vunpack.c.h.b16 %v101
    %v403 = vunpack.c.l.b16 %v102
    %v404 = vunpack.c.h.b16 %v102
    %v405 = vunpack.c.l.b16 %v103
    %v406 = vunpack.c.h.b16 %v103
    %v407 = vunpack.c.l.b16 %v104
    %v408 = vunpack.c.h.b16 %v104
    %v409 = vunpack.c.l.b16 %v105
    %v410 = vunpack.c.h.b16 %v105
    %v411 = vunpack.c.l.b16 %v106
    %v412 = vunpack.c.h.b16 %v106
    %v413 = vunpack.c.l.b16 %v107
    %v414 = vunpack.c.h.b16 %v107
    %v415 = vunpack.c.l.b16 %v108
    %v416 = vunpack.c.h.b16 %v108
    %v417 = vunpack.c.l.b16 %v109
    %v418 = vunpack.c.h.b16 %v109
    %v419 = vunpack.c.l.b16 %v110
    %v420 = vunpack.c.h.b16 %v110
    %v421 = vunpack.c.l.b16 %v111
    %v422 = vunpack.c.h.b16 %v111
    %v423 = vunpack.c.l.b16 %v112
    %v424 = vunpack.c.h.b16 %v112
    %v425 = vunpack.c.l.b16 %v113
    %v426 = vunpack.c.h.b16 %v113
    %v427 = vunpack.c.l.b16 %v114
    %v428 = vunpack.c.h.b16 %v114
    %v429 = vunpack.c.l.b16 %v115
    %v430 = vunpack.c.h.b16 %v115
    %v431 = vunpack.c.l.b16 %v116
    %v432 = vunpack.c.h.b16 %v116
    %v433 = vunpack.c.l.b16 %v117
    %v434 = vunpack.c.h.b16 %v117
    %v435 = vunpack.c.l.b16 %v118
    %v436 = vunpack.c.h.b16 %v118
    %v437 = vunpack.c.l.b16 %v119
    %v438 = vunpack.c.h.b16 %v119
    %v439 = vunpack.c.l.b16 %v120
    %v440 = vunpack.c.h.b16 %v120
    %v441 = vunpack.c.l.b16 %v121
    %v442 = vunpack.c.h.b16 %v121
    %v443 = vunpack.c.l.b16 %v122
    %v444 = vunpack.c.h.b16 %v122
    %v445 = vunpack.c.l.b16 %v123
    %v446 = vunpack.c.h.b16 %v123
    %v447 = vunpack.c.l.b16 %v124
    %v448 = vunpack.c.h.b16 %v124
    %v449 = vunpack.c.l.b16 %v125
    %v450 = vunpack.c.h.b16 %v125
    %v451 = vunpack.c.l.b16 %v126
    %v452 = vunpack.c.h.b16 %v126
    %v453 = vunpack.c.l.b16 %v127
    %v454 = vunpack.c.h.b16 %v127
    %v455 = vunpack.c.l.b16 %v128
    %v456 = vunpack.c.h.b16 %v128
    %v457 = vunpack.c.l.b16 %v129
    %v458 = vunpack.c.h.b16 %v129
    %v459 = vunpack.c.l.b16 %v130
    %v460 = vunpack.c.h.b16 %v130
    %v461 = vunpack.c.l.b16 %v131
    %v462 = vunpack.c.h.b16 %v131
    %v463 = vunpack.c.l.b16 %v132
    %v464 = vunpack.c.h.b16 %v132
    %v465 = vunpack.c.l.b16 %v133
    %v466 = vunpack.c.h.b16 %v133
    %v467 = vunpack.c.l.b16 %v134
    %v468 = vunpack.c.h.b16 %v134
    %v469 = vunpack.c.l.b16 %v135
    %v470 = vunpack.c.h.b16 %v135
    %v471 = vunpack.c.l.b16 %v136
    %v472 = vunpack.c.h.b16 %v136
    %v473 = vunpack.c.l.b16 %v137
    %v474 = vunpack.c.h.b16 %v137
    %v475 = vunpack.c.l.b16 %v138
    %v476 = vunpack.c.h.b16 %v138
    %v477 = vunpack.c.l.b16 %v139
    %v478 = vunpack.c.h.b16 %v139
    %v479 = vunpack.c.l.b16 %v140
    %v480 = vunpack.c.h.b16 %v140
    %v481 = vunpack.c.l.b16 %v141
    %v482 = vunpack.c.h.b16 %v141
    %v483 = vunpack.c.l.b16 %v142
    %v484 = vunpack.c.h.b16 %v142
    %v485 = vunpack.c.l.b16 %v143
    %v486 = vunpack.c.h.b16 %v143
    %v487 = vunpack.c.l.b16 %v144
    %v488 = vunpack.c.h.b16 %v144
    %v489 = vunpack.c.l.b16 %v145
    %v490 = vunpack.c.h.b16 %v145
    %v491 = vunpack.c.l.b16 %v146
    %v492 = vunpack.c.h.b16 %v146
    %v493 = vunpack.c.l.b16 %v147
    %v494 = vunpack.c.h.b16 %v147
    %v495 = vunpack.c.l.b16 %v148
    %v496 = vunpack.c.h.b16 %v148
    %v497 = vunpack.c.l.b16 %v149
    %v498 = vunpack.c.h.b16 %v149
    %v499 = vunpack.c.l.b16 %v150
    %v500 = vunpack.c.h.b16 %v150
    %v501 = vunpack.c.l.b16 %v151
    %v502 = vunpack.c.h.b16 %v151
    %v503 = vunpack.c.l.b16 %v152
    %v504 = vunpack.c.h.b16 %v152
    %v505 = vunpack.c.l.b16 %v153
    %v506 = vunpack.c.h.b16 %v153
    %v507 = vunpack.c.l.b16 %v154
    %v508 = vunpack.c.h.b16 %v154
    %v509 = vunpack.c.l.b16 %v155
    %v510 = vunpack.c.h.b16 %v155
    %v511 = vunpack.c.l.b16 %v156
    %v512 = vunpack.c.h.b16 %v156
    %v513 = vunpack.c.l.b16 %v157
    %v514 = vunpack.c.h.b16 %v157
    %v515 = vunpack.c.l.b16 %v158
    %v516 = vunpack.c.h.b16 %v158
    %v517 = vunpack.c.l.b16 %v159
    %v518 = vunpack.c.h.b16 %v159
    %v519 = vunpack.c.l.b16 %v160
    %v520 = vunpack.c.h.b16 %v160
    %v521 = vunpack.c.l.b16 %v161
    %v522 = vunpack.c.h.b16 %v161
    %v523 = vunpack.c.l.b16 %v162
    %v524 = vunpack.c.h.b16 %v162
    %v525 = vunpack.c.l.b16 %v163
    %v526 = vunpack.c.h.b16 %v163
    %v527 = vunpack.c.l.b16 %v164
    %v528 = vunpack.c.h.b16 %v164
    %v529 = vunpack.c.l.b16 %v165
    %v530 = vunpack.c.h.b16 %v165
    %v531 = vunpack.c.l.b16 %v166
    %v532 = vunpack.c.h.b16 %v166
    %v533 = vunpack.c.l.b16 %v167
    %v534 = vunpack.c.h.b16 %v167
    %v535 = vunpack.c.l.b16 %v168
    %v536 = vunpack.c.h.b16 %v168
    %v537 = vunpack.c.l.b16 %v169
    %v538 = vunpack.c.h.b16 %v169
    %v539 = vunpack.c.l.b16 %v170
    %v540 = vunpack.c.h.b16 %v170
    %v541 = vunpack.c.l.b16 %v171
    %v542 = vunpack.c.h.b16 %v171
    %v543 = vunpack.c.l.b16 %v172
    %v544 = vunpack.c.h.b16 %v172
    %v545 = vunpack.c.l.b16 %v173
    %v546 = vunpack.c.h.b16 %v173
    %v547 = vunpack.c.l.b16 %v174
    %v548 = vunpack.c.h.b16 %v174
    %v549 = vunpack.c.l.b16 %v175
    %v550 = vunpack.c.h.b16 %v175
    %v551 = vunpack.c.l.b16 %v176
    %v552 = vunpack.c.h.b16 %v176
    %v553 = vunpack.c.l.b16 %v177
    %v554 = vunpack.c.h.b16 %v177
    %v555 = vunpack.c.l.b16 %v178
    %v556 = vunpack.c.h.b16 %v178
    %v557 = vunpack.c.l.b16 %v179
    %v558 = vunpack.c.h.b16 %v179
    %v559 = vunpack.c.l.b16 %v180
    %v560 = vunpack.c.h.b16 %v180
    %v561 = vunpack.c.l.b16 %v181
    %v562 = vunpack.c.h.b16 %v181
    %v563 = vunpack.c.l.b16 %v182
    %v564 = vunpack.c.h.b16 %v182
    %v565 = vunpack.c.l.b16 %v183
    %v566 = vunpack.c.h.b16 %v183
    %v567 = vunpack.c.l.b16 %v184
    %v568 = vunpack.c.h.b16 %v184
    %v569 = vpack.c.b16 %v347, %v345
    %v570 = vpack.c.b16 %v348, %v346
    %v571 = vpack.c.b16 %v351, %v349
    %v572 = vpack.c.b16 %v352, %v350
    %v573 = vpack.c.b16 %v355, %v353
    %v574 = vpack.c.b16 %v356, %v354
    %v575 = vpack.c.b16 %v359, %v357
    %v576 = vpack.c.b16 %v360, %v358
    %v577 = vpack.c.b16 %v363, %v361
    %v578 = vpack.c.b16 %v364, %v362
    %v579 = vpack.c.b16 %v367, %v365
    %v580 = vpack.c.b16 %v368, %v366
    %v581 = vpack.c.b16 %v371, %v369
    %v582 = vpack.c.b16 %v372, %v370
    %v583 = vpack.c.b16 %v375, %v373
    %v584 = vpack.c.b16 %v376, %v374
    %v585 = vpack.c.b16 %v379, %v377
    %v586 = vpack.c.b16 %v380, %v378
    %v587 = vpack.c.b16 %v383, %v381
    %v588 = vpack.c.b16 %v384, %v382
    %v589 = vpack.c.b16 %v387, %v385
    %v590 = vpack.c.b16 %v388, %v386
    %v591 = vpack.c.b16 %v391, %v389
    %v592 = vpack.c.b16 %v392, %v390
    %v593 = vpack.c.b16 %v395, %v393
    %v594 = vpack.c.b16 %v396, %v394
    %v595 = vpack.c.b16 %v399, %v397
    %v596 = vpack.c.b16 %v400, %v398
    %v597 = vpack.c.b16 %v403, %v401
    %v598 = vpack.c.b16 %v404, %v402
    %v599 = vpack.c.b16 %v407, %v405
    %v600 = vpack.c.b16 %v408, %v406
    %v601 = vpack.c.b16 %v411, %v409
    %v602 = vpack.c.b16 %v412, %v410
    %v603 = vpack.c.b16 %v415, %v413
    %v604 = vpack.c.b16 %v416, %v414
    %v605 = vpack.c.b16 %v419, %v417
    %v606 = vpack.c.b16 %v420, %v418
    %v607 = vpack.c.b16 %v423, %v421
    %v608 = vpack.c.b16 %v424, %v422
    %v609 = vpack.c.b16 %v427, %v425
    %v610 = vpack.c.b16 %v428, %v426
    %v611 = vpack.c.b16 %v431, %v429
    %v612 = vpack.c.b16 %v432, %v430
    %v613 = vpack.c.b16 %v435, %v433
    %v614 = vpack.c.b16 %v436, %v434
    %v615 = vpack.c.b16 %v439, %v437
    %v616 = vpack.c.b16 %v440, %v438
    %v617 = vpack.c.b16 %v443, %v441
    %v618 = vpack.c.b16 %v444, %v442
    %v619 = vpack.c.b16 %v447, %v445
    %v620 = vpack.c.b16 %v448, %v446
    %v621 = vpack.c.b16 %v451, %v449
    %v622 = vpack.c.b16 %v452, %v450
    %v623 = vpack.c.b16 %v455, %v453
    %v624 = vpack.c.b16 %v456, %v454
    %v625 = vpack.c.b16 %v459, %v457
    %v626 = vpack.c.b16 %v460, %v458
    %v627 = vpack.c.b16 %v463, %v461
    %v628 = vpack.c.b16 %v464, %v462
    %v629 = vpack.c.b16 %v467, %v465
    %v630 = vpack.c.b16 %v468, %v466
    %v631 = vpack.c.b16 %v471, %v469
    %v632 = vpack.c.b16 %v472, %v470
    %v633 = vpack.c.b16 %v475, %v473
    %v634 = vpack.c.b16 %v476, %v474
    %v635 = vpack.c.b16 %v479, %v477
    %v636 = vpack.c.b16 %v480, %v478
    %v637 = vpack.c.b16 %v483, %v481
    %v638 = vpack.c.b16 %v484, %v482
    %v639 = vpack.c.b16 %v487, %v485
    %v640 = vpack.c.b16 %v488, %v486
    %v641 = vpack.c.b16 %v491, %v489
    %v642 = vpack.c.b16 %v492, %v490
    %v643 = vpack.c.b16 %v495, %v493
    %v644 = vpack.c.b16 %v496, %v494
    %v645 = vpack.c.b16 %v499, %v497
    %v646 = vpack.c.b16 %v500, %v498
    %v647 = vpack.c.b16 %v503, %v501
    %v648 = vpack.c.b16 %v504, %v502
    %v649 = vpack.c.b16 %v507, %v505
    %v650 = vpack.c.b16 %v508, %v506
    %v651 = vpack.c.b16 %v511, %v509
    %v652 = vpack.c.b16 %v512, %v510
    %v653 = vpack.c.b16 %v515, %v513
    %v654 = vpack.c.b16 %v516, %v514
    %v655 = vpack.c.b16 %v519, %v517
    %v656 = vpack.c.b16 %v520, %v518
    %v657 = vpack.c.b16 %v523, %v521
    %v658 = vpack.c.b16 %v524, %v522
    %v659 = vpack.c.b16 %v527, %v525
    %v660 = vpack.c.b16 %v528, %v526
    %v661 = vpack.c.b16 %v531, %v529
    %v662 = vpack.c.b16 %v532, %v530
    %v663 = vpack.c.b16 %v535, %v533
    %v664 = vpack.c.b16 %v536, %v534
    %v665 = vpack.c.b16 %v539, %v537
    %v666 = vpack.c.b16 %v540, %v538
    %v667 = vpack.c.b16 %v543, %v541
    %v668 = vpack.c.b16 %v544, %v542
    %v669 = vpack.c.b16 %v547, %v545
    %v670 = vpack.c.b16 %v548, %v546
    %v671 = vpack.c.b16 %v551, %v549
    %v672 = vpack.c.b16 %v552, %v550
    %v673 = vpack.c.b16 %v555, %v553
    %v674 = vpack.c.b16 %v556, %v554
    %v675 = vpack.c.b16 %v559, %v557
    %v676 = vpack.c.b16 %v560, %v558
    %v677 = vpack.c.b16 %v563, %v561
    %v678 = vpack.c.b16 %v564, %v562
    %v679 = vpack.c.b16 %v567, %v565
    %v680 = vpack.c.b16 %v568, %v566
    %793 = vmatprep.subr.bf16.mxu0 %v570
    %794 = vmatpush1.bf16.msra.mxu0 %v569
    %795 = vmatprep.subr.bf16.mxu0 %v572
    %796 = vmatpush1.bf16.msra.mxu0 %v571
    %797 = vmatprep.subr.bf16.mxu0 %v574
    %798 = vmatpush1.bf16.msra.mxu0 %v573
    %799 = vmatprep.subr.bf16.mxu0 %v576
    %800 = vmatpush1.bf16.msra.mxu0 %v575
    %801 = vmatprep.subr.bf16.mxu0 %v578
    %802 = vmatpush1.bf16.msra.mxu0 %v577
    %803 = vmatprep.subr.bf16.mxu0 %v580
    %804 = vmatpush1.bf16.msra.mxu0 %v579
    %805 = vmatprep.subr.bf16.mxu0 %v582
    %806 = vmatpush1.bf16.msra.mxu0 %v581
    %807 = vmatprep.subr.bf16.mxu0 %v584
    %808 = vmatpush1.bf16.msra.mxu0 %v583
    %809 = vmatprep.subr.bf16.mxu0 %v586
    %810 = vmatpush1.bf16.msra.mxu0 %v585
    %811 = vmatprep.subr.bf16.mxu0 %v588
    %812 = vmatpush1.bf16.msra.mxu0 %v587
    %813 = vmatprep.subr.bf16.mxu0 %v590
    %814 = vmatpush1.bf16.msra.mxu0 %v589
    %815 = vmatprep.subr.bf16.mxu0 %v592
    %816 = vmatpush1.bf16.msra.mxu0 %v591
    %817 = vmatprep.subr.bf16.mxu0 %v594
    %818 = vmatpush1.bf16.msra.mxu0 %v593
    %819 = vmatprep.subr.bf16.mxu0 %v596
    %820 = vmatpush1.bf16.msra.mxu0 %v595
    %821 = vmatprep.subr.bf16.mxu0 %v598
    %822 = vmatpush1.bf16.msra.mxu0 %v597
    %823 = vmatprep.subr.bf16.mxu0 %v600
    %824 = vmatpush1.bf16.msra.mxu0 %v599
    %825 = vmatprep.mubr.bf16.mxu0 %v220
    %826 = vmatmul.mubr.bf16.gmra.mrb[0].mxu0 %v219
    %v827 = vpop.f32.mrb[0].mxu0
    %v828 = vadd.f32 %v190, %v827
    %v829 = vpop.f32.mrb[0].mxu0
    %v830 = vadd.f32 %v194, %v829
    %v831 = vpop.f32.mrb[0].mxu0
    %v832 = vadd.f32 %v190, %v831
    %v833 = vpop.f32.mrb[0].mxu0
    %v834 = vadd.f32 %v194, %v833
    %835 = vdwg.mxu0
    %836 = vmatprep.subr.bf16.mxu0 %v602
    %837 = vmatpush1.bf16.msra.mxu0 %v601
    %838 = vmatprep.subr.bf16.mxu0 %v604
    %839 = vmatpush1.bf16.msra.mxu0 %v603
    %840 = vmatprep.subr.bf16.mxu0 %v606
    %841 = vmatpush1.bf16.msra.mxu0 %v605
    %842 = vmatprep.subr.bf16.mxu0 %v608
    %843 = vmatpush1.bf16.msra.mxu0 %v607
    %844 = vmatprep.subr.bf16.mxu0 %v610
    %845 = vmatpush1.bf16.msra.mxu0 %v609
    %846 = vmatprep.subr.bf16.mxu0 %v612
    %847 = vmatpush1.bf16.msra.mxu0 %v611
    %848 = vmatprep.subr.bf16.mxu0 %v614
    %849 = vmatpush1.bf16.msra.mxu0 %v613
    %850 = vmatprep.subr.bf16.mxu0 %v616
    %851 = vmatpush1.bf16.msra.mxu0 %v615
    %852 = vmatprep.subr.bf16.mxu0 %v618
    %853 = vmatpush1.bf16.msra.mxu0 %v617
    %854 = vmatprep.subr.bf16.mxu0 %v620
    %855 = vmatpush1.bf16.msra.mxu0 %v619
    %856 = vmatprep.subr.bf16.mxu0 %v622
    %857 = vmatpush1.bf16.msra.mxu0 %v621
    %858 = vmatprep.subr.bf16.mxu0 %v624
    %859 = vmatpush1.bf16.msra.mxu0 %v623
    %860 = vmatprep.subr.bf16.mxu0 %v626
    %861 = vmatpush1.bf16.msra.mxu0 %v625
    %862 = vmatprep.subr.bf16.mxu0 %v628
    %863 = vmatpush1.bf16.msra.mxu0 %v627
    %864 = vmatprep.subr.bf16.mxu0 %v630
    %865 = vmatpush1.bf16.msra.mxu0 %v629
    %866 = vmatprep.subr.bf16.mxu0 %v632
    %867 = vmatpush1.bf16.msra.mxu0 %v631
    %868 = vmatprep.mubr.bf16.mxu0 %v222
    %869 = vmatmul.mubr.bf16.gmra.mrb[0].mxu0 %v221
    %v870 = vpop.f32.mrb[0].mxu0
    %v871 = vadd.f32 %v828, %v870
    %v872 = vpop.f32.mrb[0].mxu0
    %v873 = vadd.f32 %v830, %v872
    %v874 = vpop.f32.mrb[0].mxu0
    %v875 = vadd.f32 %v832, %v874
    %v876 = vpop.f32.mrb[0].mxu0
    %v877 = vadd.f32 %v834, %v876
    %878 = vdwg.mxu0
    %879 = vmatprep.subr.bf16.mxu0 %v634
    %880 = vmatpush1.bf16.msra.mxu0 %v633
    %881 = vmatprep.subr.bf16.mxu0 %v636
    %882 = vmatpush1.bf16.msra.mxu0 %v635
    %883 = vmatprep.subr.bf16.mxu0 %v638
    %884 = vmatpush1.bf16.msra.mxu0 %v637
    %885 = vmatprep.subr.bf16.mxu0 %v640
    %886 = vmatpush1.bf16.msra.mxu0 %v639
    %887 = vmatprep.subr.bf16.mxu0 %v642
    %888 = vmatpush1.bf16.msra.mxu0 %v641
    %889 = vmatprep.subr.bf16.mxu0 %v644
    %890 = vmatpush1.bf16.msra.mxu0 %v643
    %891 = vmatprep.subr.bf16.mxu0 %v646
    %892 = vmatpush1.bf16.msra.mxu0 %v645
    %893 = vmatprep.subr.bf16.mxu0 %v648
    %894 = vmatpush1.bf16.msra.mxu0 %v647
    %895 = vmatprep.subr.bf16.mxu0 %v650
    %896 = vmatpush1.bf16.msra.mxu0 %v649
    %897 = vmatprep.subr.bf16.mxu0 %v652
    %898 = vmatpush1.bf16.msra.mxu0 %v651
    %899 = vmatprep.subr.bf16.mxu0 %v654
    %900 = vmatpush1.bf16.msra.mxu0 %v653
    %901 = vmatprep.subr.bf16.mxu0 %v656
    %902 = vmatpush1.bf16.msra.mxu0 %v655
    %903 = vmatprep.subr.bf16.mxu0 %v658
    %904 = vmatpush1.bf16.msra.mxu0 %v657
    %905 = vmatprep.subr.bf16.mxu0 %v660
    %906 = vmatpush1.bf16.msra.mxu0 %v659
    %907 = vmatprep.subr.bf16.mxu0 %v662
    %908 = vmatpush1.bf16.msra.mxu0 %v661
    %909 = vmatprep.subr.bf16.mxu0 %v664
    %910 = vmatpush1.bf16.msra.mxu0 %v663
    %911 = vmatprep.mubr.bf16.mxu0 %v224
    %912 = vmatmul.mubr.bf16.gmra.mrb[0].mxu0 %v223
    %v913 = vpop.f32.mrb[0].mxu0
    %v914 = vadd.f32 %v871, %v913
    %v915 = vpop.f32.mrb[0].mxu0
    %v916 = vadd.f32 %v873, %v915
    %v917 = vpop.f32.mrb[0].mxu0
    %v918 = vadd.f32 %v875, %v917
    %v919 = vpop.f32.mrb[0].mxu0
    %v920 = vadd.f32 %v877, %v919
    %921 = vdwg.mxu0
    %922 = vmatprep.subr.bf16.mxu0 %v666
    %923 = vmatpush1.bf16.msra.mxu0 %v665
    %924 = vmatprep.subr.bf16.mxu0 %v668
    %925 = vmatpush1.bf16.msra.mxu0 %v667
    %926 = vmatprep.subr.bf16.mxu0 %v670
    %927 = vmatpush1.bf16.msra.mxu0 %v669
    %928 = vmatprep.subr.bf16.mxu0 %v672
    %929 = vmatpush1.bf16.msra.mxu0 %v671
    %930 = vmatprep.subr.bf16.mxu0 %v674
    %931 = vmatpush1.bf16.msra.mxu0 %v673
    %932 = vmatprep.subr.bf16.mxu0 %v676
    %933 = vmatpush1.bf16.msra.mxu0 %v675
    %934 = vmatprep.subr.bf16.mxu0 %v678
    %935 = vmatpush1.bf16.msra.mxu0 %v677
    %936 = vmatprep.subr.bf16.mxu0 %v680
    %937 = vmatpush1.bf16.msra.mxu0 %v679
    %938 = vmatprep.subr.bf16.mxu0 0
    %939 = vmatpush1.bf16.msra.mxu0 0
    %940 = vmatprep.subr.bf16.mxu0 0
    %941 = vmatpush1.bf16.msra.mxu0 0
    %942 = vmatprep.subr.bf16.mxu0 0
    %943 = vmatpush1.bf16.msra.mxu0 0
    %944 = vmatprep.subr.bf16.mxu0 0
    %945 = vmatpush1.bf16.msra.mxu0 0
    %946 = vmatprep.subr.bf16.mxu0 0
    %947 = vmatpush1.bf16.msra.mxu0 0
    %948 = vmatprep.subr.bf16.mxu0 0
    %949 = vmatpush1.bf16.msra.mxu0 0
    %950 = vmatprep.subr.bf16.mxu0 0
    %951 = vmatpush1.bf16.msra.mxu0 0
    %952 = vmatprep.subr.bf16.mxu0 0
    %953 = vmatpush1.bf16.msra.mxu0 0
    %954 = vmatprep.mubr.bf16.mxu0 0
    %955 = vmatmul.mubr.bf16.gmra.mrb[0].mxu0 %v225
    %v956 = vpop.f32.mrb[0].mxu0
    %v957 = vadd.f32 %v914, %v956
    %v958 = vpop.f32.mrb[0].mxu0
    %v959 = vadd.f32 %v916, %v958
    %v960 = vpop.f32.mrb[0].mxu0
    %v961 = vadd.f32 %v918, %v960
    %v962 = vpop.f32.mrb[0].mxu0
    %v963 = vadd.f32 %v920, %v962
    %964 = vdwg.mxu0
    %v965 = vmax.f32 %v957, 0.0
    %v966 = vmax.f32 %v959, 0.0
    %v967 = vmax.f32 %v961, 0.0
    %v968 = vmax.f32 %v963, 0.0
    %v969 = vpack.c.bf16 %v967, %v965
    %v970 = vpack.c.bf16 %v968, %v966
    %v971 = vld [vmem:[%s3] sm:$0xf]
    %v972 = vld [vmem:[%s3 + $0x4] sm:$0xf]
    %v973 = vld [vmem:[%s3 + $0x8] sm:$0xf]
    %v974 = vld [vmem:[%s3 + $0xc] sm:$0xf]
    %v975 = vld [vmem:[%s3 + $0x10] sm:$0xf]
    %v976 = vld [vmem:[%s3 + $0x14] sm:$0xf]
    %v977 = vld [vmem:[%s3 + $0x18] sm:$0xf]
    %v978 = vld [vmem:[%s3 + $0x1c] sm:$0xf]
    %v979 = vld [vmem:[%s3 + $0x20] sm:$0xf]
    %v980 = vld [vmem:[%s3 + $0x24] sm:$0xf]
    %v981 = vld [vmem:[%s3 + $0x28] sm:$0xf]
    %v982 = vld [vmem:[%s3 + $0x2c] sm:$0xf]
    %v983 = vld [vmem:[%s3 + $0x30] sm:$0xf]
    %v984 = vld [vmem:[%s3 + $0x34] sm:$0xf]
    %v985 = vld [vmem:[%s3 + $0x38] sm:$0xf]
    %v986 = vld [vmem:[%s3 + $0x3c] sm:$0xf]
    %v987 = vld [vmem:[%s3 + $0x40] sm:$0xf]
    %v988 = vld [vmem:[%s3 + $0x44] sm:$0xf]
    %v989 = vld [vmem:[%s3 + $0x48] sm:$0xf]
    %v990 = vld [vmem:[%s3 + $0x4c] sm:$0xf]
    %v991 = vld [vmem:[%s3 + $0x50] sm:$0xf]
    %v992 = vld [vmem:[%s3 + $0x54] sm:$0xf]
    %v993 = vld [vmem:[%s3 + $0x58] sm:$0xf]
    %v994 = vld [vmem:[%s3 + $0x5c] sm:$0xf]
    %v995 = vld [vmem:[%s3 + $0x60] sm:$0xf]
    %v996 = vld [vmem:[%s3 + $0x64] sm:$0xf]
    %v997 = vld [vmem:[%s3 + $0x68] sm:$0xf]
    %v998 = vld [vmem:[%s3 + $0x6c] sm:$0xf]
    %v999 = vld [vmem:[%s3 + $0x70] sm:$0xf]
    %v1000 = vld [vmem:[%s3 + $0x74] sm:$0xf]
    %v1001 = vld [vmem:[%s3 + $0x78] sm:$0xf]
    %v1002 = vld [vmem:[%s3 + $0x7c] sm:$0xf]
    %v1003 = vld [vmem:[%s4] sm:$0x1]
    %v1005 = vlaneseq
    %v1006 = vshrl.u32 %v1005, 7
    %v1007 = vsub.s32 0, %v1006
    %v1008 = vrot.slane %v1003, %v1007
    %v1042 = vunpack.c.l.b16 %v971
    %v1043 = vunpack.c.l.b16 %v972
    %v1044 = vunpack.c.l.b16 %v973
    %v1045 = vunpack.c.l.b16 %v974
    %v1046 = vunpack.c.l.b16 %v975
    %v1047 = vunpack.c.l.b16 %v976
    %v1048 = vunpack.c.l.b16 %v977
    %v1049 = vunpack.c.l.b16 %v978
    %v1050 = vunpack.c.l.b16 %v979
    %v1051 = vunpack.c.l.b16 %v980
    %v1052 = vunpack.c.l.b16 %v981
    %v1053 = vunpack.c.l.b16 %v982
    %v1054 = vunpack.c.l.b16 %v983
    %v1055 = vunpack.c.l.b16 %v984
    %v1056 = vunpack.c.l.b16 %v985
    %v1057 = vunpack.c.l.b16 %v986
    %v1058 = vunpack.c.l.b16 %v987
    %v1059 = vunpack.c.l.b16 %v988
    %v1060 = vunpack.c.l.b16 %v989
    %v1061 = vunpack.c.l.b16 %v990
    %v1062 = vunpack.c.l.b16 %v991
    %v1063 = vunpack.c.l.b16 %v992
    %v1064 = vunpack.c.l.b16 %v993
    %v1065 = vunpack.c.l.b16 %v994
    %v1066 = vunpack.c.l.b16 %v995
    %v1067 = vunpack.c.l.b16 %v996
    %v1068 = vunpack.c.l.b16 %v997
    %v1069 = vunpack.c.l.b16 %v998
    %v1070 = vunpack.c.l.b16 %v999
    %v1071 = vunpack.c.l.b16 %v1000
    %v1072 = vunpack.c.l.b16 %v1001
    %v1073 = vunpack.c.l.b16 %v1002
    %v1074 = vpack.c.b16 %v1043, %v1042
    %v1075 = vpack.c.b16 %v1045, %v1044
    %v1076 = vpack.c.b16 %v1047, %v1046
    %v1077 = vpack.c.b16 %v1049, %v1048
    %v1078 = vpack.c.b16 %v1051, %v1050
    %v1079 = vpack.c.b16 %v1053, %v1052
    %v1080 = vpack.c.b16 %v1055, %v1054
    %v1081 = vpack.c.b16 %v1057, %v1056
    %v1082 = vpack.c.b16 %v1059, %v1058
    %v1083 = vpack.c.b16 %v1061, %v1060
    %v1084 = vpack.c.b16 %v1063, %v1062
    %v1085 = vpack.c.b16 %v1065, %v1064
    %v1086 = vpack.c.b16 %v1067, %v1066
    %v1087 = vpack.c.b16 %v1069, %v1068
    %v1088 = vpack.c.b16 %v1071, %v1070
    %v1089 = vpack.c.b16 %v1073, %v1072
    %1106 = vmatprep.subr.bf16.mxu0 0
    %1107 = vmatpush1.bf16.msra.mxu0 %v1074
    %1108 = vmatprep.subr.bf16.mxu0 0
    %1109 = vmatpush1.bf16.msra.mxu0 %v1075
    %1110 = vmatprep.subr.bf16.mxu0 0
    %1111 = vmatpush1.bf16.msra.mxu0 %v1076
    %1112 = vmatprep.subr.bf16.mxu0 0
    %1113 = vmatpush1.bf16.msra.mxu0 %v1077
    %1114 = vmatprep.subr.bf16.mxu0 0
    %1115 = vmatpush1.bf16.msra.mxu0 %v1078
    %1116 = vmatprep.subr.bf16.mxu0 0
    %1117 = vmatpush1.bf16.msra.mxu0 %v1079
    %1118 = vmatprep.subr.bf16.mxu0 0
    %1119 = vmatpush1.bf16.msra.mxu0 %v1080
    %1120 = vmatprep.subr.bf16.mxu0 0
    %1121 = vmatpush1.bf16.msra.mxu0 %v1081
    %1122 = vmatprep.subr.bf16.mxu0 0
    %1123 = vmatpush1.bf16.msra.mxu0 %v1082
    %1124 = vmatprep.subr.bf16.mxu0 0
    %1125 = vmatpush1.bf16.msra.mxu0 %v1083
    %1126 = vmatprep.subr.bf16.mxu0 0
    %1127 = vmatpush1.bf16.msra.mxu0 %v1084
    %1128 = vmatprep.subr.bf16.mxu0 0
    %1129 = vmatpush1.bf16.msra.mxu0 %v1085
    %1130 = vmatprep.subr.bf16.mxu0 0
    %1131 = vmatpush1.bf16.msra.mxu0 %v1086
    %1132 = vmatprep.subr.bf16.mxu0 0
    %1133 = vmatpush1.bf16.msra.mxu0 %v1087
    %1134 = vmatprep.subr.bf16.mxu0 0
    %1135 = vmatpush1.bf16.msra.mxu0 %v1088
    %1136 = vmatprep.subr.bf16.mxu0 0
    %1137 = vmatpush1.bf16.msra.mxu0 %v1089
    %1138 = vmatprep.mubr.bf16.mxu0 %v970
    %1139 = vmatmul.mubr.bf16.gmra.mrb[0].mxu0 %v969
    %v1140 = vpop.f32.mrb[0].mxu0
    %v1141 = vadd.f32 %v1008, %v1140
    %v1142 = vpop.f32.mrb[0].mxu0
    %v1143 = vpop.f32.mrb[0].mxu0
    %v1144 = vadd.f32 %v1008, %v1143
    %v1145 = vpop.f32.mrb[0].mxu0
    %1146 = vdwg.mxu0
    %v1147 = vmul.f32 %v1141, 0.5
    %v1148 = vmul.f32 %v1144, 0.5
    %v1149 = vmul.f32 %v1147, 1.442695
    %v1150 = vpow.pop %v1149
    %v1151 = vmul.f32 %v1148, 1.442695
    %v1152 = vpow.pop %v1151
    %v1153 = vld [vmem:[%s9] sm:$0xff]
    %v1154 = vld [vmem:[%s9 + $0x8] sm:$0xff]
    %1157 = vrot.lane.b32.xlu0 %v1153, 32
    %v1158 = vpop.permute.xlu0 %1157
    %1159 = vrot.lane.b32.xlu0 %v1154, 32
    %v1160 = vpop.permute.xlu0 %1159
    %v1163 = vmul.f32 %v1150, %v1158
    %v1164 = vmul.f32 %v1152, %v1160
    %1167 = vrot.lane.b32.xlu0 %v1163, 96
    %v1168 = vpop.permute.xlu0 %1167
    %1169 = vrot.lane.b32.xlu0 %v1164, 96
    %v1170 = vpop.permute.xlu0 %1169
    %v1173 = vadd.f32 %v1141, %v1168
    %v1174 = vadd.f32 %v1144, %v1170
    %v1175 = vpack.c.bf16 %v1174, %v1173
    %v1176 = vld [vmem:[%s5] sm:$0xff]
    %v1177 = vld [vmem:[%s5 + $0x8] sm:$0xff]
    %v1178 = vld [vmem:[%s5 + $0x10] sm:$0xff]
    %v1179 = vld [vmem:[%s5 + $0x18] sm:$0xff]
    %v1180 = vld [vmem:[%s6] sm:$0x3]
    %v1182 = vlaneseq
    %v1183 = vshrl.u32 %v1182, 7
    %v1184 = vsub.s32 0, %v1183
    %v1185 = vrot.slane %v1180, %v1184
    %v1186 = vlaneseq
    %v1187 = vshrl.u32 %v1186, 7
    %v1188 = vsub.s32 1, %v1187
    %v1189 = vrot.slane %v1180, %v1188
    %v1196 = vunpack.c.l.b16 %v1176
    %v1197 = vunpack.c.h.b16 %v1176
    %v1198 = vunpack.c.l.b16 %v1177
    %v1199 = vunpack.c.h.b16 %v1177
    %v1200 = vunpack.c.l.b16 %v1178
    %v1201 = vunpack.c.h.b16 %v1178
    %v1202 = vunpack.c.l.b16 %v1179
    %v1203 = vunpack.c.h.b16 %v1179
    %v1204 = vpack.c.b16 %v1198, %v1196
    %v1205 = vpack.c.b16 %v1199, %v1197
    %v1206 = vpack.c.b16 %v1202, %v1200
    %v1207 = vpack.c.b16 %v1203, %v1201
    %vm1212 = vcmask 261120
    %v1214 = vsel %vm1212, %v1175, 0
    %1216 = vmatprep.subr.bf16.mxu0 %v1205
    %1217 = vmatpush1.bf16.msra.mxu0 %v1204
    %1218 = vmatprep.subr.bf16.mxu0 %v1207
    %1219 = vmatpush1.bf16.msra.mxu0 %v1206
    %1220 = vmatprep.subr.bf16.mxu0 0
    %1221 = vmatpush1.bf16.msra.mxu0 0
    %1222 = vmatprep.subr.bf16.mxu0 0
    %1223 = vmatpush1.bf16.msra.mxu0 0
    %1224 = vmatprep.subr.bf16.mxu0 0
    %1225 = vmatpush1.bf16.msra.mxu0 0
    %1226 = vmatprep.subr.bf16.mxu0 0
    %1227 = vmatpush1.bf16.msra.mxu0 0
    %1228 = vmatprep.subr.bf16.mxu0 0
    %1229 = vmatpush1.bf16.msra.mxu0 0
    %1230 = vmatprep.subr.bf16.mxu0 0
    %1231 = vmatpush1.bf16.msra.mxu0 0
    %1232 = vmatprep.subr.bf16.mxu0 0
    %1233 = vmatpush1.bf16.msra.mxu0 0
    %1234 = vmatprep.subr.bf16.mxu0 0
    %1235 = vmatpush1.bf16.msra.mxu0 0
    %1236 = vmatprep.subr.bf16.mxu0 0
    %1237 = vmatpush1.bf16.msra.mxu0 0
    %1238 = vmatprep.subr.bf16.mxu0 0
    %1239 = vmatpush1.bf16.msra.mxu0 0
    %1240 = vmatprep.subr.bf16.mxu0 0
    %1241 = vmatpush1.bf16.msra.mxu0 0
    %1242 = vmatprep.subr.bf16.mxu0 0
    %1243 = vmatpush1.bf16.msra.mxu0 0
    %1244 = vmatprep.subr.bf16.mxu0 0
    %1245 = vmatpush1.bf16.msra.mxu0 0
    %1246 = vmatprep.subr.bf16.mxu0 0
    %1247 = vmatpush1.bf16.msra.mxu0 0
    %1248 = vmatprep.mubr.bf16.mxu0 0
    %1249 = vmatmul.mubr.bf16.gmra.mrb[0].mxu0 %v1214
    %v1250 = vpop.f32.mrb[0].mxu0
    %v1251 = vadd.f32 %v1185, %v1250
    %v1252 = vpop.f32.mrb[0].mxu0
    %v1253 = vadd.f32 %v1189, %v1252
    %v1254 = vpop.f32.mrb[0].mxu0
    %v1255 = vadd.f32 %v1185, %v1254
    %v1256 = vpop.f32.mrb[0].mxu0
    %v1257 = vadd.f32 %v1189, %v1256
    %1258 = vdwg.mxu0
    %v1259 = vmax.f32 %v1251, 0.0
    %v1260 = vmax.f32 %v1253, 0.0
    %v1261 = vmax.f32 %v1255, 0.0
    %v1262 = vmax.f32 %v1257, 0.0
    %v1263 = vpack.c.bf16 %v1261, %v1259
    %v1264 = vpack.c.bf16 %v1262, %v1260
    %v1265 = vld [vmem:[#allocation5] sm:$0xff]
    %v1266 = vld [vmem:[#allocation5 + $0x8] sm:$0xff]
    %v1267 = vld [vmem:[#allocation5 + $0x10] sm:$0xff]
    %v1268 = vld [vmem:[#allocation5 + $0x18] sm:$0xf]
    %v1269 = vld [vmem:[#allocation5 + $0x1c] sm:$0xff]
    %v1270 = vld [vmem:[#allocation5 + $0x24] sm:$0xff]
    %v1271 = vld [vmem:[#allocation5 + $0x2c] sm:$0xff]
    %v1272 = vld [vmem:[#allocation5 + $0x34] sm:$0xf]
    %v1273 = vld [vmem:[#allocation5 + $0x38] sm:$0xff]
    %v1274 = vld [vmem:[#allocation5 + $0x40] sm:$0xff]
    %v1275 = vld [vmem:[#allocation5 + $0x48] sm:$0xff]
    %v1276 = vld [vmem:[#allocation5 + $0x50] sm:$0xf]
    %v1277 = vld [vmem:[#allocation5 + $0x54] sm:$0xff]
    %v1278 = vld [vmem:[#allocation5 + $0x5c] sm:$0xff]
    %v1279 = vld [vmem:[#allocation5 + $0x64] sm:$0xff]
    %v1280 = vld [vmem:[#allocation5 + $0x6c] sm:$0xf]
    %v1281 = vld [vmem:[#allocation5 + $0x70] sm:$0xff]
    %v1282 = vld [vmem:[#allocation5 + $0x78] sm:$0xff]
    %v1283 = vld [vmem:[#allocation5 + $0x80] sm:$0xff]
    %v1284 = vld [vmem:[#allocation5 + $0x88] sm:$0xf]
    %v1285 = vld [vmem:[#allocation5 + $0x8c] sm:$0xff]
    %v1286 = vld [vmem:[#allocation5 + $0x94] sm:$0xff]
    %v1287 = vld [vmem:[#allocation5 + $0x9c] sm:$0xff]
    %v1288 = vld [vmem:[#allocation5 + $0xa4] sm:$0xf]
    %v1289 = vld [vmem:[#allocation5 + $0xa8] sm:$0xff]
    %v1290 = vld [vmem:[#allocation5 + $0xb0] sm:$0xff]
    %v1291 = vld [vmem:[#allocation5 + $0xb8] sm:$0xff]
    %v1292 = vld [vmem:[#allocation5 + $0xc0] sm:$0xf]
    %v1293 = vld [vmem:[#allocation5 + $0xc4] sm:$0xff]
    %v1294 = vld [vmem:[#allocation5 + $0xcc] sm:$0xff]
    %v1295 = vld [vmem:[#allocation5 + $0xd4] sm:$0xff]
    %v1296 = vld [vmem:[#allocation5 + $0xdc] sm:$0xf]
    %v1297 = vld [vmem:[#allocation5 + $0xe0] sm:$0xff]
    %v1298 = vld [vmem:[#allocation5 + $0xe8] sm:$0xff]
    %v1299 = vld [vmem:[#allocation5 + $0xf0] sm:$0xff]
    %v1300 = vld [vmem:[#allocation5 + $0xf8] sm:$0xf]
    %v1301 = vld [vmem:[#allocation5 + $0xfc] sm:$0xff]
    %v1302 = vld [vmem:[#allocation5 + $0x104] sm:$0xff]
    %v1303 = vld [vmem:[#allocation5 + $0x10c] sm:$0xff]
    %v1304 = vld [vmem:[#allocation5 + $0x114] sm:$0xf]
    %v1305 = vld [vmem:[#allocation5 + $0x118] sm:$0xff]
    %v1306 = vld [vmem:[#allocation5 + $0x120] sm:$0xff]
    %v1307 = vld [vmem:[#allocation5 + $0x128] sm:$0xff]
    %v1308 = vld [vmem:[#allocation5 + $0x130] sm:$0xf]
    %v1309 = vld [vmem:[#allocation5 + $0x134] sm:$0xff]
    %v1310 = vld [vmem:[#allocation5 + $0x13c] sm:$0xff]
    %v1311 = vld [vmem:[#allocation5 + $0x144] sm:$0xff]
    %v1312 = vld [vmem:[#allocation5 + $0x14c] sm:$0xf]
    %v1313 = vld [vmem:[#allocation5 + $0x150] sm:$0xff]
    %v1314 = vld [vmem:[#allocation5 + $0x158] sm:$0xff]
    %v1315 = vld [vmem:[#allocation5 + $0x160] sm:$0xff]
    %v1316 = vld [vmem:[#allocation5 + $0x168] sm:$0xf]
    %v1317 = vld [vmem:[#allocation5 + $0x16c] sm:$0xff]
    %v1318 = vld [vmem:[#allocation5 + $0x174] sm:$0xff]
    %v1319 = vld [vmem:[#allocation5 + $0x17c] sm:$0xff]
    %v1320 = vld [vmem:[#allocation5 + $0x184] sm:$0xf]
    %v1321 = vld [vmem:[#allocation5 + $0x188] sm:$0xff]
    %v1322 = vld [vmem:[#allocation5 + $0x190] sm:$0xff]
    %v1323 = vld [vmem:[#allocation5 + $0x198] sm:$0xff]
    %v1324 = vld [vmem:[#allocation5 + $0x1a0] sm:$0xf]
    %v1325 = vld [vmem:[#allocation5 + $0x1a4] sm:$0xff]
    %v1326 = vld [vmem:[#allocation5 + $0x1ac] sm:$0xff]
    %v1327 = vld [vmem:[#allocation5 + $0x1b4] sm:$0xff]
    %v1328 = vld [vmem:[#allocation5 + $0x1bc] sm:$0xf]
    %v1329 = vld [vmem:[#allocation5 + $0x1c0] sm:$0xff]
    %v1330 = vld [vmem:[#allocation5 + $0x1c8] sm:$0xff]
    %v1331 = vld [vmem:[#allocation5 + $0x1d0] sm:$0xff]
    %v1332 = vld [vmem:[#allocation5 + $0x1d8] sm:$0xf]
    %v1333 = vld [vmem:[#allocation5 + $0x1dc] sm:$0xff]
    %v1334 = vld [vmem:[#allocation5 + $0x1e4] sm:$0xff]
    %v1335 = vld [vmem:[#allocation5 + $0x1ec] sm:$0xff]
    %v1336 = vld [vmem:[#allocation5 + $0x1f4] sm:$0xf]
    %v1337 = vld [vmem:[#allocation5 + $0x1f8] sm:$0xff]
    %v1338 = vld [vmem:[#allocation5 + $0x200] sm:$0xff]
    %v1339 = vld [vmem:[#allocation5 + $0x208] sm:$0xff]
    %v1340 = vld [vmem:[#allocation5 + $0x210] sm:$0xf]
    %v1341 = vld [vmem:[#allocation5 + $0x214] sm:$0xff]
    %v1342 = vld [vmem:[#allocation5 + $0x21c] sm:$0xff]
    %v1343 = vld [vmem:[#allocation5 + $0x224] sm:$0xff]
    %v1344 = vld [vmem:[#allocation5 + $0x22c] sm:$0xf]
    %v1345 = vld [vmem:[#allocation5 + $0x230] sm:$0xff]
    %v1346 = vld [vmem:[#allocation5 + $0x238] sm:$0xff]
    %v1347 = vld [vmem:[#allocation5 + $0x240] sm:$0xff]
    %v1348 = vld [vmem:[#allocation5 + $0x248] sm:$0xf]
    %v1349 = vld [vmem:[#allocation5 + $0x24c] sm:$0xff]
    %v1350 = vld [vmem:[#allocation5 + $0x254] sm:$0xff]
    %v1351 = vld [vmem:[#allocation5 + $0x25c] sm:$0xff]
    %v1352 = vld [vmem:[#allocation5 + $0x264] sm:$0xf]
    %v1353 = vld [vmem:[#allocation5 + $0x268] sm:$0xff]
    %v1354 = vld [vmem:[#allocation5 + $0x270] sm:$0xff]
    %v1355 = vld [vmem:[#allocation5 + $0x278] sm:$0xff]
    %v1356 = vld [vmem:[#allocation5 + $0x280] sm:$0xf]
    %v1357 = vld [vmem:[#allocation5 + $0x284] sm:$0xff]
    %v1358 = vld [vmem:[#allocation5 + $0x28c] sm:$0xff]
    %v1359 = vld [vmem:[#allocation5 + $0x294] sm:$0xff]
    %v1360 = vld [vmem:[#allocation5 + $0x29c] sm:$0xf]
    %v1361 = vld [vmem:[#allocation5 + $0x2a0] sm:$0xff]
    %v1362 = vld [vmem:[#allocation5 + $0x2a8] sm:$0xff]
    %v1363 = vld [vmem:[#allocation5 + $0x2b0] sm:$0xff]
    %v1364 = vld [vmem:[#allocation5 + $0x2b8] sm:$0xf]
    %v1365 = vld [vmem:[#allocation5 + $0x2bc] sm:$0xff]
    %v1366 = vld [vmem:[#allocation5 + $0x2c4] sm:$0xff]
    %v1367 = vld [vmem:[#allocation5 + $0x2cc] sm:$0xff]
    %v1368 = vld [vmem:[#allocation5 + $0x2d4] sm:$0xf]
    %v1369 = vld [vmem:[#allocation5 + $0x2d8] sm:$0xff]
    %v1370 = vld [vmem:[#allocation5 + $0x2e0] sm:$0xff]
    %v1371 = vld [vmem:[#allocation5 + $0x2e8] sm:$0xff]
    %v1372 = vld [vmem:[#allocation5 + $0x2f0] sm:$0xf]
    %v1373 = vld [vmem:[#allocation5 + $0x2f4] sm:$0xff]
    %v1374 = vld [vmem:[#allocation5 + $0x2fc] sm:$0xff]
    %v1375 = vld [vmem:[#allocation5 + $0x304] sm:$0xff]
    %v1376 = vld [vmem:[#allocation5 + $0x30c] sm:$0xf]
    %v1377 = vld [vmem:[#allocation5 + $0x310] sm:$0xff]
    %v1378 = vld [vmem:[#allocation5 + $0x318] sm:$0xff]
    %v1379 = vld [vmem:[#allocation5 + $0x320] sm:$0xff]
    %v1380 = vld [vmem:[#allocation5 + $0x328] sm:$0xf]
    %v1381 = vld [vmem:[#allocation5 + $0x32c] sm:$0xff]
    %v1382 = vld [vmem:[#allocation5 + $0x334] sm:$0xff]
    %v1383 = vld [vmem:[#allocation5 + $0x33c] sm:$0xff]
    %v1384 = vld [vmem:[#allocation5 + $0x344] sm:$0xf]
    %v1385 = vld [vmem:[#allocation5 + $0x348] sm:$0xff]
    %v1386 = vld [vmem:[#allocation5 + $0x350] sm:$0xff]
    %v1387 = vld [vmem:[#allocation5 + $0x358] sm:$0xff]
    %v1388 = vld [vmem:[#allocation5 + $0x360] sm:$0xf]
    %v1389 = vld [vmem:[#allocation5 + $0x364] sm:$0xff]
    %v1390 = vld [vmem:[#allocation5 + $0x36c] sm:$0xff]
    %v1391 = vld [vmem:[#allocation5 + $0x374] sm:$0xff]
    %v1392 = vld [vmem:[#allocation5 + $0x37c] sm:$0xf]
    %v1393 = vld [vmem:[%s8] sm:$0xff]
    %v1395 = vlaneseq
    %v1396 = vshrl.u32 %v1395, 7
    %v1397 = vsub.s32 0, %v1396
    %v1398 = vrot.slane %v1393, %v1397
    %v1399 = vlaneseq
    %v1400 = vshrl.u32 %v1399, 7
    %v1401 = vsub.s32 1, %v1400
    %v1402 = vrot.slane %v1393, %v1401
    %v1403 = vlaneseq
    %v1404 = vshrl.u32 %v1403, 7
    %v1405 = vsub.s32 2, %v1404
    %v1406 = vrot.slane %v1393, %v1405
    %v1407 = vlaneseq
    %v1408 = vshrl.u32 %v1407, 7
    %v1409 = vsub.s32 3, %v1408
    %v1410 = vrot.slane %v1393, %v1409
    %v1411 = vlaneseq
    %v1412 = vshrl.u32 %v1411, 7
    %v1413 = vsub.s32 4, %v1412
    %v1414 = vrot.slane %v1393, %v1413
    %v1415 = vlaneseq
    %v1416 = vshrl.u32 %v1415, 7
    %v1417 = vsub.s32 5, %v1416
    %v1418 = vrot.slane %v1393, %v1417
    %v1419 = vlaneseq
    %v1420 = vshrl.u32 %v1419, 7
    %v1421 = vsub.s32 6, %v1420
    %v1422 = vrot.slane %v1393, %v1421
    %v1558 = vunpack.c.l.b16 %v1265
    %v1559 = vunpack.c.h.b16 %v1265
    %v1560 = vunpack.c.l.b16 %v1266
    %v1561 = vunpack.c.h.b16 %v1266
    %v1562 = vunpack.c.l.b16 %v1267
    %v1563 = vunpack.c.h.b16 %v1267
    %v1564 = vunpack.c.l.b16 %v1268
    %v1565 = vunpack.c.l.b16 %v1269
    %v1566 = vunpack.c.h.b16 %v1269
    %v1567 = vunpack.c.l.b16 %v1270
    %v1568 = vunpack.c.h.b16 %v1270
    %v1569 = vunpack.c.l.b16 %v1271
    %v1570 = vunpack.c.h.b16 %v1271
    %v1571 = vunpack.c.l.b16 %v1272
    %v1572 = vunpack.c.l.b16 %v1273
    %v1573 = vunpack.c.h.b16 %v1273
    %v1574 = vunpack.c.l.b16 %v1274
    %v1575 = vunpack.c.h.b16 %v1274
    %v1576 = vunpack.c.l.b16 %v1275
    %v1577 = vunpack.c.h.b16 %v1275
    %v1578 = vunpack.c.l.b16 %v1276
    %v1579 = vunpack.c.l.b16 %v1277
    %v1580 = vunpack.c.h.b16 %v1277
    %v1581 = vunpack.c.l.b16 %v1278
    %v1582 = vunpack.c.h.b16 %v1278
    %v1583 = vunpack.c.l.b16 %v1279
    %v1584 = vunpack.c.h.b16 %v1279
    %v1585 = vunpack.c.l.b16 %v1280
    %v1586 = vunpack.c.l.b16 %v1281
    %v1587 = vunpack.c.h.b16 %v1281
    %v1588 = vunpack.c.l.b16 %v1282
    %v1589 = vunpack.c.h.b16 %v1282
    %v1590 = vunpack.c.l.b16 %v1283
    %v1591 = vunpack.c.h.b16 %v1283
    %v1592 = vunpack.c.l.b16 %v1284
    %v1593 = vunpack.c.l.b16 %v1285
    %v1594 = vunpack.c.h.b16 %v1285
    %v1595 = vunpack.c.l.b16 %v1286
    %v1596 = vunpack.c.h.b16 %v1286
    %v1597 = vunpack.c.l.b16 %v1287
    %v1598 = vunpack.c.h.b16 %v1287
    %v1599 = vunpack.c.l.b16 %v1288
    %v1600 = vunpack.c.l.b16 %v1289
    %v1601 = vunpack.c.h.b16 %v1289
    %v1602 = vunpack.c.l.b16 %v1290
    %v1603 = vunpack.c.h.b16 %v1290
    %v1604 = vunpack.c.l.b16 %v1291
    %v1605 = vunpack.c.h.b16 %v1291
    %v1606 = vunpack.c.l.b16 %v1292
    %v1607 = vunpack.c.l.b16 %v1293
    %v1608 = vunpack.c.h.b16 %v1293
    %v1609 = vunpack.c.l.b16 %v1294
    %v1610 = vunpack.c.h.b16 %v1294
    %v1611 = vunpack.c.l.b16 %v1295
    %v1612 = vunpack.c.h.b16 %v1295
    %v1613 = vunpack.c.l.b16 %v1296
    %v1614 = vunpack.c.l.b16 %v1297
    %v1615 = vunpack.c.h.b16 %v1297
    %v1616 = vunpack.c.l.b16 %v1298
    %v1617 = vunpack.c.h.b16 %v1298
    %v1618 = vunpack.c.l.b16 %v1299
    %v1619 = vunpack.c.h.b16 %v1299
    %v1620 = vunpack.c.l.b16 %v1300
    %v1621 = vunpack.c.l.b16 %v1301
    %v1622 = vunpack.c.h.b16 %v1301
    %v1623 = vunpack.c.l.b16 %v1302
    %v1624 = vunpack.c.h.b16 %v1302
    %v1625 = vunpack.c.l.b16 %v1303
    %v1626 = vunpack.c.h.b16 %v1303
    %v1627 = vunpack.c.l.b16 %v1304
    %v1628 = vunpack.c.l.b16 %v1305
    %v1629 = vunpack.c.h.b16 %v1305
    %v1630 = vunpack.c.l.b16 %v1306
    %v1631 = vunpack.c.h.b16 %v1306
    %v1632 = vunpack.c.l.b16 %v1307
    %v1633 = vunpack.c.h.b16 %v1307
    %v1634 = vunpack.c.l.b16 %v1308
    %v1635 = vunpack.c.l.b16 %v1309
    %v1636 = vunpack.c.h.b16 %v1309
    %v1637 = vunpack.c.l.b16 %v1310
    %v1638 = vunpack.c.h.b16 %v1310
    %v1639 = vunpack.c.l.b16 %v1311
    %v1640 = vunpack.c.h.b16 %v1311
    %v1641 = vunpack.c.l.b16 %v1312
    %v1642 = vunpack.c.l.b16 %v1313
    %v1643 = vunpack.c.h.b16 %v1313
    %v1644 = vunpack.c.l.b16 %v1314
    %v1645 = vunpack.c.h.b16 %v1314
    %v1646 = vunpack.c.l.b16 %v1315
    %v1647 = vunpack.c.h.b16 %v1315
    %v1648 = vunpack.c.l.b16 %v1316
    %v1649 = vunpack.c.l.b16 %v1317
    %v1650 = vunpack.c.h.b16 %v1317
    %v1651 = vunpack.c.l.b16 %v1318
    %v1652 = vunpack.c.h.b16 %v1318
    %v1653 = vunpack.c.l.b16 %v1319
    %v1654 = vunpack.c.h.b16 %v1319
    %v1655 = vunpack.c.l.b16 %v1320
    %v1656 = vunpack.c.l.b16 %v1321
    %v1657 = vunpack.c.h.b16 %v1321
    %v1658 = vunpack.c.l.b16 %v1322
    %v1659 = vunpack.c.h.b16 %v1322
    %v1660 = vunpack.c.l.b16 %v1323
    %v1661 = vunpack.c.h.b16 %v1323
    %v1662 = vunpack.c.l.b16 %v1324
    %v1663 = vunpack.c.l.b16 %v1325
    %v1664 = vunpack.c.h.b16 %v1325
    %v1665 = vunpack.c.l.b16 %v1326
    %v1666 = vunpack.c.h.b16 %v1326
    %v1667 = vunpack.c.l.b16 %v1327
    %v1668 = vunpack.c.h.b16 %v1327
    %v1669 = vunpack.c.l.b16 %v1328
    %v1670 = vunpack.c.l.b16 %v1329
    %v1671 = vunpack.c.h.b16 %v1329
    %v1672 = vunpack.c.l.b16 %v1330
    %v1673 = vunpack.c.h.b16 %v1330
    %v1674 = vunpack.c.l.b16 %v1331
    %v1675 = vunpack.c.h.b16 %v1331
    %v1676 = vunpack.c.l.b16 %v1332
    %v1677 = vunpack.c.l.b16 %v1333
    %v1678 = vunpack.c.h.b16 %v1333
    %v1679 = vunpack.c.l.b16 %v1334
    %v1680 = vunpack.c.h.b16 %v1334
    %v1681 = vunpack.c.l.b16 %v1335
    %v1682 = vunpack.c.h.b16 %v1335
    %v1683 = vunpack.c.l.b16 %v1336
    %v1684 = vunpack.c.l.b16 %v1337
    %v1685 = vunpack.c.h.b16 %v1337
    %v1686 = vunpack.c.l.b16 %v1338
    %v1687 = vunpack.c.h.b16 %v1338
    %v1688 = vunpack.c.l.b16 %v1339
    %v1689 = vunpack.c.h.b16 %v1339
    %v1690 = vunpack.c.l.b16 %v1340
    %v1691 = vunpack.c.l.b16 %v1341
    %v1692 = vunpack.c.h.b16 %v1341
    %v1693 = vunpack.c.l.b16 %v1342
    %v1694 = vunpack.c.h.b16 %v1342
    %v1695 = vunpack.c.l.b16 %v1343
    %v1696 = vunpack.c.h.b16 %v1343
    %v1697 = vunpack.c.l.b16 %v1344
    %v1698 = vunpack.c.l.b16 %v1345
    %v1699 = vunpack.c.h.b16 %v1345
    %v1700 = vunpack.c.l.b16 %v1346
    %v1701 = vunpack.c.h.b16 %v1346
    %v1702 = vunpack.c.l.b16 %v1347
    %v1703 = vunpack.c.h.b16 %v1347
    %v1704 = vunpack.c.l.b16 %v1348
    %v1705 = vunpack.c.l.b16 %v1349
    %v1706 = vunpack.c.h.b16 %v1349
    %v1707 = vunpack.c.l.b16 %v1350
    %v1708 = vunpack.c.h.b16 %v1350
    %v1709 = vunpack.c.l.b16 %v1351
    %v1710 = vunpack.c.h.b16 %v1351
    %v1711 = vunpack.c.l.b16 %v1352
    %v1712 = vunpack.c.l.b16 %v1353
    %v1713 = vunpack.c.h.b16 %v1353
    %v1714 = vunpack.c.l.b16 %v1354
    %v1715 = vunpack.c.h.b16 %v1354
    %v1716 = vunpack.c.l.b16 %v1355
    %v1717 = vunpack.c.h.b16 %v1355
    %v1718 = vunpack.c.l.b16 %v1356
    %v1719 = vunpack.c.l.b16 %v1357
    %v1720 = vunpack.c.h.b16 %v1357
    %v1721 = vunpack.c.l.b16 %v1358
    %v1722 = vunpack.c.h.b16 %v1358
    %v1723 = vunpack.c.l.b16 %v1359
    %v1724 = vunpack.c.h.b16 %v1359
    %v1725 = vunpack.c.l.b16 %v1360
    %v1726 = vunpack.c.l.b16 %v1361
    %v1727 = vunpack.c.h.b16 %v1361
    %v1728 = vunpack.c.l.b16 %v1362
    %v1729 = vunpack.c.h.b16 %v1362
    %v1730 = vunpack.c.l.b16 %v1363
    %v1731 = vunpack.c.h.b16 %v1363
    %v1732 = vunpack.c.l.b16 %v1364
    %v1733 = vunpack.c.l.b16 %v1365
    %v1734 = vunpack.c.h.b16 %v1365
    %v1735 = vunpack.c.l.b16 %v1366
    %v1736 = vunpack.c.h.b16 %v1366
    %v1737 = vunpack.c.l.b16 %v1367
    %v1738 = vunpack.c.h.b16 %v1367
    %v1739 = vunpack.c.l.b16 %v1368
    %v1740 = vunpack.c.l.b16 %v1369
    %v1741 = vunpack.c.h.b16 %v1369
    %v1742 = vunpack.c.l.b16 %v1370
    %v1743 = vunpack.c.h.b16 %v1370
    %v1744 = vunpack.c.l.b16 %v1371
    %v1745 = vunpack.c.h.b16 %v1371
    %v1746 = vunpack.c.l.b16 %v1372
    %v1747 = vunpack.c.l.b16 %v1373
    %v1748 = vunpack.c.h.b16 %v1373
    %v1749 = vunpack.c.l.b16 %v1374
    %v1750 = vunpack.c.h.b16 %v1374
    %v1751 = vunpack.c.l.b16 %v1375
    %v1752 = vunpack.c.h.b16 %v1375
    %v1753 = vunpack.c.l.b16 %v1376
    %v1754 = vunpack.c.l.b16 %v1377
    %v1755 = vunpack.c.h.b16 %v1377
    %v1756 = vunpack.c.l.b16 %v1378
    %v1757 = vunpack.c.h.b16 %v1378
    %v1758 = vunpack.c.l.b16 %v1379
    %v1759 = vunpack.c.h.b16 %v1379
    %v1760 = vunpack.c.l.b16 %v1380
    %v1761 = vunpack.c.l.b16 %v1381
    %v1762 = vunpack.c.h.b16 %v1381
    %v1763 = vunpack.c.l.b16 %v1382
    %v1764 = vunpack.c.h.b16 %v1382
    %v1765 = vunpack.c.l.b16 %v1383
    %v1766 = vunpack.c.h.b16 %v1383
    %v1767 = vunpack.c.l.b16 %v1384
    %v1768 = vunpack.c.l.b16 %v1385
    %v1769 = vunpack.c.h.b16 %v1385
    %v1770 = vunpack.c.l.b16 %v1386
    %v1771 = vunpack.c.h.b16 %v1386
    %v1772 = vunpack.c.l.b16 %v1387
    %v1773 = vunpack.c.h.b16 %v1387
    %v1774 = vunpack.c.l.b16 %v1388
    %v1775 = vunpack.c.l.b16 %v1389
    %v1776 = vunpack.c.h.b16 %v1389
    %v1777 = vunpack.c.l.b16 %v1390
    %v1778 = vunpack.c.h.b16 %v1390
    %v1779 = vunpack.c.l.b16 %v1391
    %v1780 = vunpack.c.h.b16 %v1391
    %v1781 = vunpack.c.l.b16 %v1392
    %v1782 = vpack.c.b16 %v1565, %v1558
    %v1783 = vpack.c.b16 %v1566, %v1559
    %v1784 = vpack.c.b16 %v1567, %v1560
    %v1785 = vpack.c.b16 %v1568, %v1561
    %v1786 = vpack.c.b16 %v1569, %v1562
    %v1787 = vpack.c.b16 %v1570, %v1563
    %v1788 = vpack.c.b16 %v1571, %v1564
    %v1789 = vpack.c.b16 %v1579, %v1572
    %v1790 = vpack.c.b16 %v1580, %v1573
    %v1791 = vpack.c.b16 %v1581, %v1574
    %v1792 = vpack.c.b16 %v1582, %v1575
    %v1793 = vpack.c.b16 %v1583, %v1576
    %v1794 = vpack.c.b16 %v1584, %v1577
    %v1795 = vpack.c.b16 %v1585, %v1578
    %v1796 = vpack.c.b16 %v1593, %v1586
    %v1797 = vpack.c.b16 %v1594, %v1587
    %v1798 = vpack.c.b16 %v1595, %v1588
    %v1799 = vpack.c.b16 %v1596, %v1589
    %v1800 = vpack.c.b16 %v1597, %v1590
    %v1801 = vpack.c.b16 %v1598, %v1591
    %v1802 = vpack.c.b16 %v1599, %v1592
    %v1803 = vpack.c.b16 %v1607, %v1600
    %v1804 = vpack.c.b16 %v1608, %v1601
    %v1805 = vpack.c.b16 %v1609, %v1602
    %v1806 = vpack.c.b16 %v1610, %v1603
    %v1807 = vpack.c.b16 %v1611, %v1604
    %v1808 = vpack.c.b16 %v1612, %v1605
    %v1809 = vpack.c.b16 %v1613, %v1606
    %v1810 = vpack.c.b16 %v1621, %v1614
    %v1811 = vpack.c.b16 %v1622, %v1615
    %v1812 = vpack.c.b16 %v1623, %v1616
    %v1813 = vpack.c.b16 %v1624, %v1617
    %v1814 = vpack.c.b16 %v1625, %v1618
    %v1815 = vpack.c.b16 %v1626, %v1619
    %v1816 = vpack.c.b16 %v1627, %v1620
    %v1817 = vpack.c.b16 %v1635, %v1628
    %v1818 = vpack.c.b16 %v1636, %v1629
    %v1819 = vpack.c.b16 %v1637, %v1630
    %v1820 = vpack.c.b16 %v1638, %v1631
    %v1821 = vpack.c.b16 %v1639, %v1632
    %v1822 = vpack.c.b16 %v1640, %v1633
    %v1823 = vpack.c.b16 %v1641, %v1634
    %v1824 = vpack.c.b16 %v1649, %v1642
    %v1825 = vpack.c.b16 %v1650, %v1643
    %v1826 = vpack.c.b16 %v1651, %v1644
    %v1827 = vpack.c.b16 %v1652, %v1645
    %v1828 = vpack.c.b16 %v1653, %v1646
    %v1829 = vpack.c.b16 %v1654, %v1647
    %v1830 = vpack.c.b16 %v1655, %v1648
    %v1831 = vpack.c.b16 %v1663, %v1656
    %v1832 = vpack.c.b16 %v1664, %v1657
    %v1833 = vpack.c.b16 %v1665, %v1658
    %v1834 = vpack.c.b16 %v1666, %v1659
    %v1835 = vpack.c.b16 %v1667, %v1660
    %v1836 = vpack.c.b16 %v1668, %v1661
    %v1837 = vpack.c.b16 %v1669, %v1662
    %v1838 = vpack.c.b16 %v1677, %v1670
    %v1839 = vpack.c.b16 %v1678, %v1671
    %v1840 = vpack.c.b16 %v1679, %v1672
    %v1841 = vpack.c.b16 %v1680, %v1673
    %v1842 = vpack.c.b16 %v1681, %v1674
    %v1843 = vpack.c.b16 %v1682, %v1675
    %v1844 = vpack.c.b16 %v1683, %v1676
    %v1845 = vpack.c.b16 %v1691, %v1684
    %v1846 = vpack.c.b16 %v1692, %v1685
    %v1847 = vpack.c.b16 %v1693, %v1686
    %v1848 = vpack.c.b16 %v1694, %v1687
    %v1849 = vpack.c.b16 %v1695, %v1688
    %v1850 = vpack.c.b16 %v1696, %v1689
    %v1851 = vpack.c.b16 %v1697, %v1690
    %v1852 = vpack.c.b16 %v1705, %v1698
    %v1853 = vpack.c.b16 %v1706, %v1699
    %v1854 = vpack.c.b16 %v1707, %v1700
    %v1855 = vpack.c.b16 %v1708, %v1701
    %v1856 = vpack.c.b16 %v1709, %v1702
    %v1857 = vpack.c.b16 %v1710, %v1703
    %v1858 = vpack.c.b16 %v1711, %v1704
    %v1859 = vpack.c.b16 %v1719, %v1712
    %v1860 = vpack.c.b16 %v1720, %v1713
    %v1861 = vpack.c.b16 %v1721, %v1714
    %v1862 = vpack.c.b16 %v1722, %v1715
    %v1863 = vpack.c.b16 %v1723, %v1716
    %v1864 = vpack.c.b16 %v1724, %v1717
    %v1865 = vpack.c.b16 %v1725, %v1718
    %v1866 = vpack.c.b16 %v1733, %v1726
    %v1867 = vpack.c.b16 %v1734, %v1727
    %v1868 = vpack.c.b16 %v1735, %v1728
    %v1869 = vpack.c.b16 %v1736, %v1729
    %v1870 = vpack.c.b16 %v1737, %v1730
    %v1871 = vpack.c.b16 %v1738, %v1731
    %v1872 = vpack.c.b16 %v1739, %v1732
    %v1873 = vpack.c.b16 %v1747, %v1740
    %v1874 = vpack.c.b16 %v1748, %v1741
    %v1875 = vpack.c.b16 %v1749, %v1742
    %v1876 = vpack.c.b16 %v1750, %v1743
    %v1877 = vpack.c.b16 %v1751, %v1744
    %v1878 = vpack.c.b16 %v1752, %v1745
    %v1879 = vpack.c.b16 %v1753, %v1746
    %v1880 = vpack.c.b16 %v1761, %v1754
    %v1881 = vpack.c.b16 %v1762, %v1755
    %v1882 = vpack.c.b16 %v1763, %v1756
    %v1883 = vpack.c.b16 %v1764, %v1757
    %v1884 = vpack.c.b16 %v1765, %v1758
    %v1885 = vpack.c.b16 %v1766, %v1759
    %v1886 = vpack.c.b16 %v1767, %v1760
    %v1887 = vpack.c.b16 %v1775, %v1768
    %v1888 = vpack.c.b16 %v1776, %v1769
    %v1889 = vpack.c.b16 %v1777, %v1770
    %v1890 = vpack.c.b16 %v1778, %v1771
    %v1891 = vpack.c.b16 %v1779, %v1772
    %v1892 = vpack.c.b16 %v1780, %v1773
    %v1893 = vpack.c.b16 %v1781, %v1774
    %2006 = vmatprep.subr.bf16.mxu0 %v1783
    %2007 = vmatpush1.bf16.msra.mxu0 %v1782
    %2008 = vmatprep.subr.bf16.mxu0 %v1790
    %2009 = vmatpush1.bf16.msra.mxu0 %v1789
    %2010 = vmatprep.subr.bf16.mxu0 %v1797
    %2011 = vmatpush1.bf16.msra.mxu0 %v1796
    %2012 = vmatprep.subr.bf16.mxu0 %v1804
    %2013 = vmatpush1.bf16.msra.mxu0 %v1803
    %2014 = vmatprep.subr.bf16.mxu0 %v1811
    %2015 = vmatpush1.bf16.msra.mxu0 %v1810
    %2016 = vmatprep.subr.bf16.mxu0 %v1818
    %2017 = vmatpush1.bf16.msra.mxu0 %v1817
    %2018 = vmatprep.subr.bf16.mxu0 %v1825
    %2019 = vmatpush1.bf16.msra.mxu0 %v1824
    %2020 = vmatprep.subr.bf16.mxu0 %v1832
    %2021 = vmatpush1.bf16.msra.mxu0 %v1831
    %2022 = vmatprep.subr.bf16.mxu0 %v1839
    %2023 = vmatpush1.bf16.msra.mxu0 %v1838
    %2024 = vmatprep.subr.bf16.mxu0 %v1846
    %2025 = vmatpush1.bf16.msra.mxu0 %v1845
    %2026 = vmatprep.subr.bf16.mxu0 %v1853
    %2027 = vmatpush1.bf16.msra.mxu0 %v1852
    %2028 = vmatprep.subr.bf16.mxu0 %v1860
    %2029 = vmatpush1.bf16.msra.mxu0 %v1859
    %2030 = vmatprep.subr.bf16.mxu0 %v1867
    %2031 = vmatpush1.bf16.msra.mxu0 %v1866
    %2032 = vmatprep.subr.bf16.mxu0 %v1874
    %2033 = vmatpush1.bf16.msra.mxu0 %v1873
    %2034 = vmatprep.subr.bf16.mxu0 %v1881
    %2035 = vmatpush1.bf16.msra.mxu0 %v1880
    %2036 = vmatprep.subr.bf16.mxu0 %v1888
    %2037 = vmatpush1.bf16.msra.mxu0 %v1887
    %2038 = vmatprep.mubr.bf16.mxu0 %v1264
    %2039 = vmatmul.mubr.bf16.gmra.mrb[0].mxu0 %v1263
    %v2040 = vpop.f32.mrb[0].mxu0
    %v2041 = vadd.f32 %v1398, %v2040
    %v2042 = vpop.f32.mrb[0].mxu0
    %v2043 = vadd.f32 %v1402, %v2042
    %v2044 = vpop.f32.mrb[0].mxu0
    %v2045 = vadd.f32 %v1398, %v2044
    %v2046 = vpop.f32.mrb[0].mxu0
    %v2047 = vadd.f32 %v1402, %v2046
    %2048 = vdwg.mxu0
    %2049 = vmatprep.subr.bf16.mxu0 %v1785
    %2050 = vmatpush1.bf16.msra.mxu0 %v1784
    %2051 = vmatprep.subr.bf16.mxu0 %v1792
    %2052 = vmatpush1.bf16.msra.mxu0 %v1791
    %2053 = vmatprep.subr.bf16.mxu0 %v1799
    %2054 = vmatpush1.bf16.msra.mxu0 %v1798
    %2055 = vmatprep.subr.bf16.mxu0 %v1806
    %2056 = vmatpush1.bf16.msra.mxu0 %v1805
    %2057 = vmatprep.subr.bf16.mxu0 %v1813
    %2058 = vmatpush1.bf16.msra.mxu0 %v1812
    %2059 = vmatprep.subr.bf16.mxu0 %v1820
    %2060 = vmatpush1.bf16.msra.mxu0 %v1819
    %2061 = vmatprep.subr.bf16.mxu0 %v1827
    %2062 = vmatpush1.bf16.msra.mxu0 %v1826
    %2063 = vmatprep.subr.bf16.mxu0 %v1834
    %2064 = vmatpush1.bf16.msra.mxu0 %v1833
    %2065 = vmatprep.subr.bf16.mxu0 %v1841
    %2066 = vmatpush1.bf16.msra.mxu0 %v1840
    %2067 = vmatprep.subr.bf16.mxu0 %v1848
    %2068 = vmatpush1.bf16.msra.mxu0 %v1847
    %2069 = vmatprep.subr.bf16.mxu0 %v1855
    %2070 = vmatpush1.bf16.msra.mxu0 %v1854
    %2071 = vmatprep.subr.bf16.mxu0 %v1862
    %2072 = vmatpush1.bf16.msra.mxu0 %v1861
    %2073 = vmatprep.subr.bf16.mxu0 %v1869
    %2074 = vmatpush1.bf16.msra.mxu0 %v1868
    %2075 = vmatprep.subr.bf16.mxu0 %v1876
    %2076 = vmatpush1.bf16.msra.mxu0 %v1875
    %2077 = vmatprep.subr.bf16.mxu0 %v1883
    %2078 = vmatpush1.bf16.msra.mxu0 %v1882
    %2079 = vmatprep.subr.bf16.mxu0 %v1890
    %2080 = vmatpush1.bf16.msra.mxu0 %v1889
    %2081 = vmatprep.mubr.bf16.mxu0 %v1264
    %2082 = vmatmul.mubr.bf16.gmra.mrb[0].mxu0 %v1263
    %v2083 = vpop.f32.mrb[0].mxu0
    %v2084 = vadd.f32 %v1406, %v2083
    %v2085 = vpop.f32.mrb[0].mxu0
    %v2086 = vadd.f32 %v1410, %v2085
    %v2087 = vpop.f32.mrb[0].mxu0
    %v2088 = vadd.f32 %v1406, %v2087
    %v2089 = vpop.f32.mrb[0].mxu0
    %v2090 = vadd.f32 %v1410, %v2089
    %2091 = vdwg.mxu0
    %2092 = vmatprep.subr.bf16.mxu0 %v1787
    %2093 = vmatpush1.bf16.msra.mxu0 %v1786
    %2094 = vmatprep.subr.bf16.mxu0 %v1794
    %2095 = vmatpush1.bf16.msra.mxu0 %v1793
    %2096 = vmatprep.subr.bf16.mxu0 %v1801
    %2097 = vmatpush1.bf16.msra.mxu0 %v1800
    %2098 = vmatprep.subr.bf16.mxu0 %v1808
    %2099 = vmatpush1.bf16.msra.mxu0 %v1807
    %2100 = vmatprep.subr.bf16.mxu0 %v1815
    %2101 = vmatpush1.bf16.msra.mxu0 %v1814
    %2102 = vmatprep.subr.bf16.mxu0 %v1822
    %2103 = vmatpush1.bf16.msra.mxu0 %v1821
    %2104 = vmatprep.subr.bf16.mxu0 %v1829
    %2105 = vmatpush1.bf16.msra.mxu0 %v1828
    %2106 = vmatprep.subr.bf16.mxu0 %v1836
    %2107 = vmatpush1.bf16.msra.mxu0 %v1835
    %2108 = vmatprep.subr.bf16.mxu0 %v1843
    %2109 = vmatpush1.bf16.msra.mxu0 %v1842
    %2110 = vmatprep.subr.bf16.mxu0 %v1850
    %2111 = vmatpush1.bf16.msra.mxu0 %v1849
    %2112 = vmatprep.subr.bf16.mxu0 %v1857
    %2113 = vmatpush1.bf16.msra.mxu0 %v1856
    %2114 = vmatprep.subr.bf16.mxu0 %v1864
    %2115 = vmatpush1.bf16.msra.mxu0 %v1863
    %2116 = vmatprep.subr.bf16.mxu0 %v1871
    %2117 = vmatpush1.bf16.msra.mxu0 %v1870
    %2118 = vmatprep.subr.bf16.mxu0 %v1878
    %2119 = vmatpush1.bf16.msra.mxu0 %v1877
    %2120 = vmatprep.subr.bf16.mxu0 %v1885
    %2121 = vmatpush1.bf16.msra.mxu0 %v1884
    %2122 = vmatprep.subr.bf16.mxu0 %v1892
    %2123 = vmatpush1.bf16.msra.mxu0 %v1891
    %2124 = vmatprep.mubr.bf16.mxu0 %v1264
    %2125 = vmatmul.mubr.bf16.gmra.mrb[0].mxu0 %v1263
    %v2126 = vpop.f32.mrb[0].mxu0
    %v2127 = vadd.f32 %v1414, %v2126
    %v2128 = vpop.f32.mrb[0].mxu0
    %v2129 = vadd.f32 %v1418, %v2128
    %v2130 = vpop.f32.mrb[0].mxu0
    %v2131 = vadd.f32 %v1414, %v2130
    %v2132 = vpop.f32.mrb[0].mxu0
    %v2133 = vadd.f32 %v1418, %v2132
    %2134 = vdwg.mxu0
    %2135 = vmatprep.subr.bf16.mxu0 0
    %2136 = vmatpush1.bf16.msra.mxu0 %v1788
    %2137 = vmatprep.subr.bf16.mxu0 0
    %2138 = vmatpush1.bf16.msra.mxu0 %v1795
    %2139 = vmatprep.subr.bf16.mxu0 0
    %2140 = vmatpush1.bf16.msra.mxu0 %v1802
    %2141 = vmatprep.subr.bf16.mxu0 0
    %2142 = vmatpush1.bf16.msra.mxu0 %v1809
    %2143 = vmatprep.subr.bf16.mxu0 0
    %2144 = vmatpush1.bf16.msra.mxu0 %v1816
    %2145 = vmatprep.subr.bf16.mxu0 0
    %2146 = vmatpush1.bf16.msra.mxu0 %v1823
    %2147 = vmatprep.subr.bf16.mxu0 0
    %2148 = vmatpush1.bf16.msra.mxu0 %v1830
    %2149 = vmatprep.subr.bf16.mxu0 0
    %2150 = vmatpush1.bf16.msra.mxu0 %v1837
    %2151 = vmatprep.subr.bf16.mxu0 0
    %2152 = vmatpush1.bf16.msra.mxu0 %v1844
    %2153 = vmatprep.subr.bf16.mxu0 0
    %2154 = vmatpush1.bf16.msra.mxu0 %v1851
    %2155 = vmatprep.subr.bf16.mxu0 0
    %2156 = vmatpush1.bf16.msra.mxu0 %v1858
    %2157 = vmatprep.subr.bf16.mxu0 0
    %2158 = vmatpush1.bf16.msra.mxu0 %v1865
    %2159 = vmatprep.subr.bf16.mxu0 0
    %2160 = vmatpush1.bf16.msra.mxu0 %v1872
    %2161 = vmatprep.subr.bf16.mxu0 0
    %2162 = vmatpush1.bf16.msra.mxu0 %v1879
    %2163 = vmatprep.subr.bf16.mxu0 0
    %2164 = vmatpush1.bf16.msra.mxu0 %v1886
    %2165 = vmatprep.subr.bf16.mxu0 0
    %2166 = vmatpush1.bf16.msra.mxu0 %v1893
    %2167 = vmatprep.mubr.bf16.mxu0 %v1264
    %2168 = vmatmul.mubr.bf16.gmra.mrb[0].mxu0 %v1263
    %v2169 = vpop.f32.mrb[0].mxu0
    %v2170 = vadd.f32 %v1422, %v2169
    %v2171 = vpop.f32.mrb[0].mxu0
    %v2172 = vpop.f32.mrb[0].mxu0
    %v2173 = vadd.f32 %v1422, %v2172
    %v2174 = vpop.f32.mrb[0].mxu0
    %2175 = vdwg.mxu0
    %v2176 = vxor.u32 %v2041, 2147483648
    %v2177 = vxor.u32 %v2043, 2147483648
    %v2178 = vxor.u32 %v2084, 2147483648
    %v2179 = vxor.u32 %v2086, 2147483648
    %v2180 = vxor.u32 %v2127, 2147483648
    %v2181 = vxor.u32 %v2129, 2147483648
    %v2182 = vxor.u32 %v2170, 2147483648
    %v2183 = vxor.u32 %v2045, 2147483648
    %v2184 = vxor.u32 %v2047, 2147483648
    %v2185 = vxor.u32 %v2088, 2147483648
    %v2186 = vxor.u32 %v2090, 2147483648
    %v2187 = vxor.u32 %v2131, 2147483648
    %v2188 = vxor.u32 %v2133, 2147483648
    %v2189 = vxor.u32 %v2173, 2147483648
    %v2190 = vmul.f32 %v2176, 1.442695
    %v2191 = vpow.pop %v2190
    %v2192 = vmul.f32 %v2177, 1.442695
    %v2193 = vpow.pop %v2192
    %v2194 = vmul.f32 %v2178, 1.442695
    %v2195 = vpow.pop %v2194
    %v2196 = vmul.f32 %v2179, 1.442695
    %v2197 = vpow.pop %v2196
    %v2198 = vmul.f32 %v2180, 1.442695
    %v2199 = vpow.pop %v2198
    %v2200 = vmul.f32 %v2181, 1.442695
    %v2201 = vpow.pop %v2200
    %v2202 = vmul.f32 %v2182, 1.442695
    %v2203 = vpow.pop %v2202
    %v2204 = vmul.f32 %v2183, 1.442695
    %v2205 = vpow.pop %v2204
    %v2206 = vmul.f32 %v2184, 1.442695
    %v2207 = vpow.pop %v2206
    %v2208 = vmul.f32 %v2185, 1.442695
    %v2209 = vpow.pop %v2208
    %v2210 = vmul.f32 %v2186, 1.442695
    %v2211 = vpow.pop %v2210
    %v2212 = vmul.f32 %v2187, 1.442695
    %v2213 = vpow.pop %v2212
    %v2214 = vmul.f32 %v2188, 1.442695
    %v2215 = vpow.pop %v2214
    %v2216 = vmul.f32 %v2189, 1.442695
    %v2217 = vpow.pop %v2216
    %v2218 = vadd.f32 %v2191, 1.0
    %v2219 = vadd.f32 %v2193, 1.0
    %v2220 = vadd.f32 %v2195, 1.0
    %v2221 = vadd.f32 %v2197, 1.0
    %v2222 = vadd.f32 %v2199, 1.0
    %v2223 = vadd.f32 %v2201, 1.0
    %v2224 = vadd.f32 %v2203, 1.0
    %v2225 = vadd.f32 %v2205, 1.0
    %v2226 = vadd.f32 %v2207, 1.0
    %v2227 = vadd.f32 %v2209, 1.0
    %v2228 = vadd.f32 %v2211, 1.0
    %v2229 = vadd.f32 %v2213, 1.0
    %v2230 = vadd.f32 %v2215, 1.0
    %v2231 = vadd.f32 %v2217, 1.0
    %v2232 = vrcp.pop %v2218
    %v2233 = vmul.f32 1.0, %v2232
    %v2234 = vrcp.pop %v2219
    %v2235 = vmul.f32 1.0, %v2234
    %v2236 = vrcp.pop %v2220
    %v2237 = vmul.f32 1.0, %v2236
    %v2238 = vrcp.pop %v2221
    %v2239 = vmul.f32 1.0, %v2238
    %v2240 = vrcp.pop %v2222
    %v2241 = vmul.f32 1.0, %v2240
    %v2242 = vrcp.pop %v2223
    %v2243 = vmul.f32 1.0, %v2242
    %v2244 = vrcp.pop %v2224
    %v2245 = vmul.f32 1.0, %v2244
    %v2246 = vrcp.pop %v2225
    %v2247 = vmul.f32 1.0, %v2246
    %v2248 = vrcp.pop %v2226
    %v2249 = vmul.f32 1.0, %v2248
    %v2250 = vrcp.pop %v2227
    %v2251 = vmul.f32 1.0, %v2250
    %v2252 = vrcp.pop %v2228
    %v2253 = vmul.f32 1.0, %v2252
    %v2254 = vrcp.pop %v2229
    %v2255 = vmul.f32 1.0, %v2254
    %v2256 = vrcp.pop %v2230
    %v2257 = vmul.f32 1.0, %v2256
    %v2258 = vrcp.pop %v2231
    %v2259 = vmul.f32 1.0, %v2258
    %2260 = vst [vmem:[#allocation7] sm:$0xff] %v2233
    %2261 = vst [vmem:[#allocation7 + $0x8] sm:$0xff] %v2235
    %2262 = vst [vmem:[#allocation7 + $0x10] sm:$0xff] %v2237
    %2263 = vst [vmem:[#allocation7 + $0x18] sm:$0xff] %v2239
    %2264 = vst [vmem:[#allocation7 + $0x20] sm:$0xff] %v2241
    %2265 = vst [vmem:[#allocation7 + $0x28] sm:$0xff] %v2243
    %2266 = vst [vmem:[#allocation7 + $0x30] sm:$0xff] %v2245
    %2267 = vst [vmem:[#allocation7 + $0x38] sm:$0xff] %v2247
    %2268 = vst [vmem:[#allocation7 + $0x40] sm:$0xff] %v2249
    %2269 = vst [vmem:[#allocation7 + $0x48] sm:$0xff] %v2251
    %2270 = vst [vmem:[#allocation7 + $0x50] sm:$0xff] %v2253
    %2271 = vst [vmem:[#allocation7 + $0x58] sm:$0xff] %v2255
    %2272 = vst [vmem:[#allocation7 + $0x60] sm:$0xff] %v2257
    %2273 = vst [vmem:[#allocation7 + $0x68] sm:$0xff] %v2259
    // Predicated region
    $region50: #{tpu_custom_call.1} parent=1 // pred_check
      _
    $region51: #{tpu_custom_call.1} parent=1 // pred_check_branch
      %2275 = sbr.rel (0) target = $region53
    $region52: #{tpu_custom_call.1} parent=1 // pred_region
      %s2277 = ssub.s32 1792, 1792
      %2278 = vsyncadd [#allocation4], %s2277
      %s2279 = sshll.u32 [#allocation7], 4
      %s2280 = int_to_ptr.vmem [resolvable:$true] %s2279
      %2285 = dma.vmem_to_hbm [thread:$0]  %s2280, 1792, %s10, [#allocation4], 896, 896, 56
    $region53: #{tpu_custom_call.1} parent=1 // pred_fallthru
      _
    // Predicated region
    $region54: #{tpu_custom_call.1} parent=1 // pred_check
      _
    $region55: #{tpu_custom_call.1} parent=1 // pred_check_branch
      %2287 = sbr.rel (0) target = $region57
    $region56: #{tpu_custom_call.1} parent=1 // pred_region
      %2288 = dma.done [#allocation4], 1792
    $region57: #{tpu_custom_call.1} parent=1 // pred_fallthru
      _
    %2289 = vsyncpa [#allocation3], 1
    %2290 = vsyncpa [#allocation6], 1
    %2291 = vsyncpa [#allocation4], 1

</llo_original>
